<compile_context>
chip_gen: v7x
topology: tpu7x:2x2x1
jax: 0.10.0
libtpu: 0.0.40
codegen_flags: <defaults>
</compile_context>

<pallas_src>
import jax
import jax.numpy as jnp
from jax import lax
from jax.experimental import pallas as pl
from jax.experimental.pallas import tpu as pltpu

WINDOW = 64                               # window_size
NUM_GLIMPSES = 3                          # 3 * 64 * 64 = 12288 (nn.Linear(12288, .))
PATCH_FEATS = WINDOW * WINDOW             # 4096 -- deduplicated activation width
IMG_FEATS = NUM_GLIMPSES * PATCH_FEATS    # 12288 -- logical Linear in-features
LANE = 128
SUBLANE = 8
TILE_B_MAX = 512                          # safe on v7x (64 MiB VMEM); v5e/v6e could go higher


def _round_up(x, m):
    return ((x + m - 1) // m) * m


def _cdiv(a, b):
    return (a + b - 1) // b


def _choose_tiling(batch):
    """Pick (tile_b, b_pad): >=2 grid steps when possible (v7x megacore) and
    batch-padding waste kept below one tile."""
    tile_b = min(TILE_B_MAX, _round_up(max(_cdiv(batch, 2), 1), SUBLANE))
    b_pad = _round_up(batch, tile_b)
    return tile_b, b_pad


# ----------------------------- Retina (JAX glue) -----------------------------
def retina_patches_flat(batch_images, location, *, out_dtype=jnp.float32, b_pad=None):
    """Replicates Retina.return_patches, deduplicated + flattened.

    batch_images: (B, C, H, W) float32 (NCHW) -- only channel 0 is used.
    location:     (B, 2) float32 in [-1, 1].

    Returns (x (b_pad, 4096) out_dtype, denormalized_location (B, 2) f32).
    The reference writes the *identical* patch into all num_glimpses slots, so
    only one copy is materialized (the duplication is folded into W1). The
    reference also mutates `location` in place, so location_model sees the
    denormalized (pixel-space) coordinates; we return those.

    The crop is a single lax.dynamic_slice per row (contiguous window) with
    edge masking; the mask/cast/flatten/pad all fuse with the slice so the
    kernel's x operand is produced directly in its final bf16 layout.
    """
    B, C, H, W = batch_images.shape
    if b_pad is None:
        b_pad = B
    assert H >= WINDOW and W >= WINDOW, "image must be at least window_size"

    # denormalize(loc, dim=height): both coords scaled by height (as in PyTorch)
    denorm = (location + 1.0) * (H * 0.5)            # (B, 2) f32

    # int() truncation toward zero; equals floor for the in-spec loc in [-1, 1].
    starts = denorm.astype(jnp.int32)                # (B, 2)
    r0 = jnp.clip(starts[:, 0], 0, H - WINDOW)
    c0 = jnp.clip(starts[:, 1], 0, W - WINDOW)
    # TODO(synk): when the window overruns the bottom/right edge, the clamped
    # dynamic_slice reads nearest-edge rows/cols for the few still-unmasked
    # positions (divergence from per-element PyTorch indexing only at edges).

    imgs = batch_images[:, 0]                        # (B, H, W)

    def crop(img, r, c):
        return lax.dynamic_slice(img, (r, c), (WINDOW, WINDOW))

    patches = jax.vmap(crop)(imgs, r0, c0)           # (B, 64, 64) f32

    offs = jnp.arange(WINDOW, dtype=jnp.float32)
    # PyTorch quirk preserved: rows bound-checked against width-1 and cols
    # against height-1 (only matters for non-square images).
    row_ok = (denorm[:, 0:1] + offs[None, :]) < (W - 1)   # (B, 64)
    col_ok = (denorm[:, 1:2] + offs[None, :]) < (H - 1)   # (B, 64)
    mask = row_ok[:, :, None] & col_ok[:, None, :]        # (B, 64, 64)

    patches = jnp.where(mask, patches, 0.0).astype(out_dtype)  # cast inside the fusion
    x = patches.reshape(B, PATCH_FEATS)
    if b_pad > B:
        x = jnp.pad(x, ((0, b_pad - B), (0, 0)))
    return x, denorm


# ----------------------------- Pallas kernel ---------------------------------
def _glimpse_kernel(x_ref, l_ref,
                    w1_ref, b1_ref,   # image_model:    (4096, HIp) bf16, (1, HIp) f32
                    w3_ref, b3_ref,   # location_model: (2, HLp) f32,     (1, HLp) f32
                    w2_ref, w4_ref,   # fc1 / fc2:      (HIp, HOp), (HLp, HOp) bf16
                    b24_ref,          # folded bias b2 + b4: (1, HOp) f32
                    out_ref):
    # Image branch: ReLU(x @ W1_eff + b1). Dominant matmul, bf16 operands on
    # the MXU with f32 accumulation.
    h_i = jnp.dot(x_ref[...], w1_ref[...], preferred_element_type=jnp.float32)
    h_i = jnp.maximum(h_i + b1_ref[...], 0.0)

    # Location branch: K=2 would waste a full MXU pass -> two broadcast FMAs
    # on the VPU instead (f32 elementwise math; v5e-safe).
    l = l_ref[...]                                   # (TB, 2) f32
    w3 = w3_ref[...]                                 # (2, HLp) f32
    h_l = l[:, 0:1] * w3[0:1, :] + l[:, 1:2] * w3[1:2, :] + b3_ref[...]
    h_l = jnp.maximum(h_l, 0.0)

    # fc1 / fc2 (bf16 MXU operands, f32 accumulation) + folded bias + ReLU.
    o = (jnp.dot(h_i.astype(w2_ref.dtype), w2_ref[...],
                 preferred_element_type=jnp.float32)
         + jnp.dot(h_l.astype(w4_ref.dtype), w4_ref[...],
                   preferred_element_type=jnp.float32)
         + b24_ref[...])
    out_ref[...] = jnp.maximum(o, 0.0)


def glimpse_net_pallas(x, loc, params, *, tile_b):
    """x: (b_pad, 4096) matmul-dtype deduplicated patch slab, loc: (b_pad, 2) f32.

    Returns (b_pad, h_image + h_loc) f32 (caller slices the logical batch)."""
    b_pad = x.shape[0]
    matmul_dtype = x.dtype
    itm = jnp.dtype(matmul_dtype).itemsize
    h_image = params["w1"].shape[1]
    h_loc = params["w3"].shape[1]
    h_out = params["b2"].shape[-1]

    # Lane-dense padded widths (multiples of 128): avoids masked vst and poor
    # MXU N-utilization; padded columns are provably zero (zero weights+bias
    # feeding a ReLU) and are sliced away afterwards.
    hi_p = _round_up(h_image, LANE)
    hl_p = _round_up(h_loc, LANE)
    ho_p = _round_up(h_out, LANE)

    # Fold the 3 identical glimpse copies into W1 (exact in f32):
    #   x_full(12288) @ W1  ==  x_patch(4096) @ sum_g W1[g*4096:(g+1)*4096]
    # (In a training loop this fold would be hoisted out and done once.)
    w1_eff = params["w1"].reshape(NUM_GLIMPSES, PATCH_FEATS, h_image).sum(axis=0)

    def pad2(a, rows, cols, dtype=jnp.float32):
        return jnp.pad(a, ((0, rows - a.shape[0]), (0, cols - a.shape[1]))).astype(dtype)

    w1 = pad2(w1_eff, PATCH_FEATS, hi_p, matmul_dtype)
    b1 = pad2(params["b1"], 1, hi_p)
    w3 = pad2(params["w3"], 2, hl_p)
    b3 = pad2(params["b3"], 1, hl_p)
    w2 = pad2(params["w2"], hi_p, ho_p, matmul_dtype)       # bf16 fc1 weights
    w4 = pad2(params["w4"], hl_p, ho_p, matmul_dtype)       # bf16 fc2 weights
    b24 = pad2(params["b2"] + params["b4"], 1, ho_p)        # folded bias

    grid = (b_pad // tile_b,)
    resident = lambda i: (0, 0)   # weights/biases stay pinned in VMEM

    # VMEM budget (pessimistic: everything double-buffered); bump the scoped
    # limit with tile size but never past v7x's 64 MiB physical VMEM.
    vmem_est = 2 * (tile_b * PATCH_FEATS * itm              # x
                    + tile_b * 2 * 4                        # loc
                    + tile_b * ho_p * 4                     # out
                    + PATCH_FEATS * hi_p * itm              # w1
                    + (hi_p + hl_p) * ho_p * itm            # w2, w4
                    + (hi_p + 3 * hl_p + ho_p) * 4)         # b1, w3, b3, b24
    vmem_limit = int(min(64 * 1024 * 1024, max(32 * 1024 * 1024, vmem_est * 5 // 4)))

    flops = 2 * b_pad * (PATCH_FEATS * hi_p + hi_p * ho_p + hl_p * ho_p + 2 * hl_p)
    bytes_accessed = (x.size * itm + loc.size * 4
                      + (w1.size + w2.size + w4.size) * itm
                      + (b1.size + w3.size + b3.size + b24.size) * 4
                      + b_pad * ho_p * 4)

    out = pl.pallas_call(
        _glimpse_kernel,
        out_shape=jax.ShapeDtypeStruct((b_pad, ho_p), jnp.float32),
        grid=grid,
        in_specs=[
            pl.BlockSpec((tile_b, PATCH_FEATS), lambda i: (i, 0)),   # x (batch-tiled)
            pl.BlockSpec((tile_b, 2), lambda i: (i, 0)),             # loc (batch-tiled)
            pl.BlockSpec((PATCH_FEATS, hi_p), resident),             # w1
            pl.BlockSpec((1, hi_p), resident),                       # b1
            pl.BlockSpec((2, hl_p), resident),                       # w3
            pl.BlockSpec((1, hl_p), resident),                       # b3
            pl.BlockSpec((hi_p, ho_p), resident),                    # w2
            pl.BlockSpec((hl_p, ho_p), resident),                    # w4
            pl.BlockSpec((1, ho_p), resident),                       # b24
        ],
        out_specs=pl.BlockSpec((tile_b, ho_p), lambda i: (i, 0)),
        compiler_params=pltpu.CompilerParams(
            dimension_semantics=("parallel",),        # batch axis shards across TCs
            vmem_limit_bytes=vmem_limit,
        ),
        cost_estimate=pl.CostEstimate(
            flops=int(flops), transcendentals=0, bytes_accessed=int(bytes_accessed)),
    )(x, loc, w1, b1, w3, b3, w2, w4, b24)

    return out[:, :h_out]


# ----------------------------- full forward ----------------------------------
def glimpse_net_forward(batch_images, location, params, *, matmul_dtype=jnp.bfloat16):
    B = batch_images.shape[0]
    tile_b, b_pad = _choose_tiling(B)
    # Gather + mask + bf16 cast + flatten + batch-pad emitted as one XLA
    # fusion: the kernel's x operand is produced directly in its final
    # (b_pad, 4096) bf16 layout -- no separate pad/astype pass.
    x, denorm = retina_patches_flat(batch_images, location,
                                    out_dtype=matmul_dtype, b_pad=b_pad)
    loc = jnp.pad(denorm, ((0, b_pad - B), (0, 0)))
    out = glimpse_net_pallas(x, loc, params, tile_b=tile_b)
    return out[:B]


def _reference_forward(batch_images, location, params):
    """Pure-JAX reference of the original (un-deduplicated, f32) math."""
    B = batch_images.shape[0]
    x_patch, denorm = retina_patches_flat(batch_images, location,
                                          out_dtype=jnp.float32, b_pad=B)
    x = jnp.tile(x_patch[:, None, :], (1, NUM_GLIMPSES, 1)).reshape(B, -1)
    hp = jax.lax.Precision.HIGHEST
    out_i = jnp.maximum(jnp.dot(x, params["w1"], precision=hp) + params["b1"], 0.0)
    out_l = jnp.maximum(jnp.dot(denorm, params["w3"], precision=hp) + params["b3"], 0.0)
    out_i = jnp.dot(out_i, params["w2"], precision=hp) + params["b2"]
    out_l = jnp.dot(out_l, params["w4"], precision=hp) + params["b4"]
    return jnp.maximum(out_i + out_l, 0.0)


def init_params(key, h_image, h_loc):
    h_out = h_image + h_loc
    ks = jax.random.split(key, 8)
    scale = 0.02
    return {
        # Linear(12288, h_image) -> stored transposed (in, out)
        "w1": scale * jax.random.normal(ks[0], (IMG_FEATS, h_image), jnp.float32),
        "b1": scale * jax.random.normal(ks[1], (1, h_image), jnp.float32),
        # Linear(2, h_loc)
        "w3": scale * jax.random.normal(ks[2], (2, h_loc), jnp.float32),
        "b3": scale * jax.random.normal(ks[3], (1, h_loc), jnp.float32),
        # fc1: Linear(h_image, h_out)
        "w2": scale * jax.random.normal(ks[4], (h_image, h_out), jnp.float32),
        "b2": scale * jax.random.normal(ks[5], (1, h_out), jnp.float32),
        # fc2: Linear(h_loc, h_out)
        "w4": scale * jax.random.normal(ks[6], (h_loc, h_out), jnp.float32),
        "b4": scale * jax.random.normal(ks[7], (1, h_out), jnp.float32),
    }


if __name__ == "__main__":
    key = jax.random.PRNGKey(0)
    k_img, k_loc, k_par = jax.random.split(key, 3)

    # Small but consistent shapes: window=64, num_glimpses=3 forced by Linear(12288, .)
    B, C, H, W = 2, 3, 72, 72
    h_image, h_loc = 32, 16

    batch_images = jax.random.normal(k_img, (B, C, H, W), jnp.float32)
    # locations in [-1, -0.8] so denormalized coords land inside the image
    location = jax.random.uniform(k_loc, (B, 2), jnp.float32,
                                  minval=-1.0, maxval=-0.8)
    params = init_params(k_par, h_image, h_loc)

    fwd = jax.jit(glimpse_net_forward)
    out = fwd(batch_images, location, params)
    out = jax.block_until_ready(out)

    ref = _reference_forward(batch_images, location, params)
    assert out.shape == (B, h_image + h_loc)
    # bf16 operands on the MXU matmuls -> compare at bf16-level tolerance.
    assert jnp.allclose(out, ref, atol=2e-2, rtol=2e-2), "mismatch vs reference"

    print("KERNEL_OK")
</pallas_src>

<mosaic_0001>
module attributes {stable_mosaic.version = 11 : i64} {
  func.func @_glimpse_kernel(%arg0: i32, %arg1: memref<8x4096xbf16, #tpu.memory_space<vmem>>, %arg2: memref<8x2xf32, #tpu.memory_space<vmem>>, %arg3: memref<4096x128xbf16, #tpu.memory_space<vmem>>, %arg4: memref<1x128xf32, #tpu.memory_space<vmem>>, %arg5: memref<2x128xf32, #tpu.memory_space<vmem>>, %arg6: memref<1x128xf32, #tpu.memory_space<vmem>>, %arg7: memref<128x128xbf16, #tpu.memory_space<vmem>>, %arg8: memref<128x128xbf16, #tpu.memory_space<vmem>>, %arg9: memref<1x128xf32, #tpu.memory_space<vmem>>, %arg10: memref<8x128xf32, #tpu.memory_space<vmem>>) attributes {dimension_semantics = [#tpu.dimension_semantics<parallel>], iteration_bounds = array<i64: 1>, scalar_prefetch = 0 : i64, scratch_operands = 0 : i64, tpu.core_type = #tpu.core_type<tc>, window_params = [{transform_indices = @transform_0, window_bounds = array<i64: 8, 4096>}, {transform_indices = @transform_1, window_bounds = array<i64: 8, 2>}, {pipeline_mode = #tpu.pipeline_mode<synchronous>, transform_indices = @transform_2, window_bounds = array<i64: 4096, 128>}, {pipeline_mode = #tpu.pipeline_mode<synchronous>, transform_indices = @transform_3, window_bounds = array<i64: 1, 128>}, {pipeline_mode = #tpu.pipeline_mode<synchronous>, transform_indices = @transform_4, window_bounds = array<i64: 2, 128>}, {pipeline_mode = #tpu.pipeline_mode<synchronous>, transform_indices = @transform_5, window_bounds = array<i64: 1, 128>}, {pipeline_mode = #tpu.pipeline_mode<synchronous>, transform_indices = @transform_6, window_bounds = array<i64: 128, 128>}, {pipeline_mode = #tpu.pipeline_mode<synchronous>, transform_indices = @transform_7, window_bounds = array<i64: 128, 128>}, {pipeline_mode = #tpu.pipeline_mode<synchronous>, transform_indices = @transform_8, window_bounds = array<i64: 1, 128>}, {transform_indices = @transform_9, window_bounds = array<i64: 8, 128>}]} {
    %c0 = arith.constant 0 : index
    %c0_0 = arith.constant 0 : index
    %0 = vector.load %arg1[%c0, %c0_0] : memref<8x4096xbf16, #tpu.memory_space<vmem>>, vector<8x4096xbf16>
    %c0_1 = arith.constant 0 : index
    %c0_2 = arith.constant 0 : index
    %1 = vector.load %arg3[%c0_1, %c0_2] : memref<4096x128xbf16, #tpu.memory_space<vmem>>, vector<4096x128xbf16>
    %cst = arith.constant dense<0.000000e+00> : vector<8x128xf32>
    %2 = tpu.matmul %0, %1, %cst {dimension_numbers = #tpu.dot_dimension_numbers<[1], [0], [0], [1], [0, 0, 1, 1], [], []>} : vector<8x4096xbf16>, vector<4096x128xbf16>, vector<8x128xf32> -> vector<8x128xf32>
    %c0_3 = arith.constant 0 : index
    %c0_4 = arith.constant 0 : index
    %3 = vector.load %arg4[%c0_3, %c0_4] : memref<1x128xf32, #tpu.memory_space<vmem>>, vector<1x128xf32>
    %4 = vector.broadcast %3 : vector<1x128xf32> to vector<8x128xf32>
    %5 = arith.addf %2, %4 : vector<8x128xf32>
    %cst_5 = arith.constant 0.000000e+00 : f32
    %6 = vector.broadcast %cst_5 : f32 to vector<8x128xf32>
    %7 = arith.maximumf %5, %6 : vector<8x128xf32>
    %c0_6 = arith.constant 0 : index
    %c0_7 = arith.constant 0 : index
    %8 = vector.load %arg2[%c0_6, %c0_7] : memref<8x2xf32, #tpu.memory_space<vmem>>, vector<8x2xf32>
    %c0_8 = arith.constant 0 : index
    %c0_9 = arith.constant 0 : index
    %9 = vector.load %arg5[%c0_8, %c0_9] : memref<2x128xf32, #tpu.memory_space<vmem>>, vector<2x128xf32>
    %10 = vector.extract_strided_slice %8 {offsets = [0, 0], sizes = [8, 1], strides = [1, 1]} : vector<8x2xf32> to vector<8x1xf32>
    %11 = vector.extract_strided_slice %9 {offsets = [0, 0], sizes = [1, 128], strides = [1, 1]} : vector<2x128xf32> to vector<1x128xf32>
    %12 = vector.broadcast %10 : vector<8x1xf32> to vector<8x128xf32>
    %13 = vector.broadcast %11 : vector<1x128xf32> to vector<8x128xf32>
    %14 = arith.mulf %12, %13 : vector<8x128xf32>
    %15 = vector.extract_strided_slice %8 {offsets = [0, 1], sizes = [8, 1], strides = [1, 1]} : vector<8x2xf32> to vector<8x1xf32>
    %16 = vector.extract_strided_slice %9 {offsets = [1, 0], sizes = [1, 128], strides = [1, 1]} : vector<2x128xf32> to vector<1x128xf32>
    %17 = vector.broadcast %15 : vector<8x1xf32> to vector<8x128xf32>
    %18 = vector.broadcast %16 : vector<1x128xf32> to vector<8x128xf32>
    %19 = arith.mulf %17, %18 : vector<8x128xf32>
    %20 = arith.addf %14, %19 : vector<8x128xf32>
    %c0_10 = arith.constant 0 : index
    %c0_11 = arith.constant 0 : index
    %21 = vector.load %arg6[%c0_10, %c0_11] : memref<1x128xf32, #tpu.memory_space<vmem>>, vector<1x128xf32>
    %22 = vector.broadcast %21 : vector<1x128xf32> to vector<8x128xf32>
    %23 = arith.addf %20, %22 : vector<8x128xf32>
    %cst_12 = arith.constant 0.000000e+00 : f32
    %24 = vector.broadcast %cst_12 : f32 to vector<8x128xf32>
    %25 = arith.maximumf %23, %24 : vector<8x128xf32>
    %26 = arith.truncf %7 : vector<8x128xf32> to vector<8x128xbf16>
    %c0_13 = arith.constant 0 : index
    %c0_14 = arith.constant 0 : index
    %27 = vector.load %arg7[%c0_13, %c0_14] : memref<128x128xbf16, #tpu.memory_space<vmem>>, vector<128x128xbf16>
    %cst_15 = arith.constant dense<0.000000e+00> : vector<8x128xf32>
    %28 = tpu.matmul %26, %27, %cst_15 {dimension_numbers = #tpu.dot_dimension_numbers<[1], [0], [0], [1], [0, 0, 1, 1], [], []>} : vector<8x128xbf16>, vector<128x128xbf16>, vector<8x128xf32> -> vector<8x128xf32>
    %29 = arith.truncf %25 : vector<8x128xf32> to vector<8x128xbf16>
    %c0_16 = arith.constant 0 : index
    %c0_17 = arith.constant 0 : index
    %30 = vector.load %arg8[%c0_16, %c0_17] : memref<128x128xbf16, #tpu.memory_space<vmem>>, vector<128x128xbf16>
    %cst_18 = arith.constant dense<0.000000e+00> : vector<8x128xf32>
    %31 = tpu.matmul %29, %30, %cst_18 {dimension_numbers = #tpu.dot_dimension_numbers<[1], [0], [0], [1], [0, 0, 1, 1], [], []>} : vector<8x128xbf16>, vector<128x128xbf16>, vector<8x128xf32> -> vector<8x128xf32>
    %32 = arith.addf %28, %31 : vector<8x128xf32>
    %c0_19 = arith.constant 0 : index
    %c0_20 = arith.constant 0 : index
    %33 = vector.load %arg9[%c0_19, %c0_20] : memref<1x128xf32, #tpu.memory_space<vmem>>, vector<1x128xf32>
    %34 = vector.broadcast %33 : vector<1x128xf32> to vector<8x128xf32>
    %35 = arith.addf %32, %34 : vector<8x128xf32>
    %cst_21 = arith.constant 0.000000e+00 : f32
    %36 = vector.broadcast %cst_21 : f32 to vector<8x128xf32>
    %37 = arith.maximumf %35, %36 : vector<8x128xf32>
    %c0_22 = arith.constant 0 : index
    %c0_23 = arith.constant 0 : index
    %38 = vector.load %arg10[%c0_22, %c0_23] : memref<8x128xf32, #tpu.memory_space<vmem>>, vector<8x128xf32>
    tpu.vector_store %arg10[%c0_22, %c0_23], %37 {strides = array<i32>} : memref<8x128xf32, #tpu.memory_space<vmem>>, vector<8x128xf32>,
    return
  }
  func.func @transform_0(%arg0: i32) -> (i32, i32) {
    %c0_i32 = arith.constant 0 : i32
    %c0_i32_0 = arith.constant 0 : i32
    return %arg0, %c0_i32 : i32, i32
  }
  func.func @transform_1(%arg0: i32) -> (i32, i32) {
    %c0_i32 = arith.constant 0 : i32
    %c0_i32_0 = arith.constant 0 : i32
    return %arg0, %c0_i32 : i32, i32
  }
  func.func @transform_2(%arg0: i32) -> (i32, i32) {
    %c0_i32 = arith.constant 0 : i32
    %c0_i32_0 = arith.constant 0 : i32
    %c0_i32_1 = arith.constant 0 : i32
    return %c0_i32, %c0_i32_0 : i32, i32
  }
  func.func @transform_3(%arg0: i32) -> (i32, i32) {
    %c0_i32 = arith.constant 0 : i32
    %c0_i32_0 = arith.constant 0 : i32
    %c0_i32_1 = arith.constant 0 : i32
    return %c0_i32, %c0_i32_0 : i32, i32
  }
  func.func @transform_4(%arg0: i32) -> (i32, i32) {
    %c0_i32 = arith.constant 0 : i32
    %c0_i32_0 = arith.constant 0 : i32
    %c0_i32_1 = arith.constant 0 : i32
    return %c0_i32, %c0_i32_0 : i32, i32
  }
  func.func @transform_5(%arg0: i32) -> (i32, i32) {
    %c0_i32 = arith.constant 0 : i32
    %c0_i32_0 = arith.constant 0 : i32
    %c0_i32_1 = arith.constant 0 : i32
    return %c0_i32, %c0_i32_0 : i32, i32
  }
  func.func @transform_6(%arg0: i32) -> (i32, i32) {
    %c0_i32 = arith.constant 0 : i32
    %c0_i32_0 = arith.constant 0 : i32
    %c0_i32_1 = arith.constant 0 : i32
    return %c0_i32, %c0_i32_0 : i32, i32
  }
  func.func @transform_7(%arg0: i32) -> (i32, i32) {
    %c0_i32 = arith.constant 0 : i32
    %c0_i32_0 = arith.constant 0 : i32
    %c0_i32_1 = arith.constant 0 : i32
    return %c0_i32, %c0_i32_0 : i32, i32
  }
  func.func @transform_8(%arg0: i32) -> (i32, i32) {
    %c0_i32 = arith.constant 0 : i32
    %c0_i32_0 = arith.constant 0 : i32
    %c0_i32_1 = arith.constant 0 : i32
    return %c0_i32, %c0_i32_0 : i32, i32
  }
  func.func @transform_9(%arg0: i32) -> (i32, i32) {
    %c0_i32 = arith.constant 0 : i32
    %c0_i32_0 = arith.constant 0 : i32
    return %arg0, %c0_i32 : i32, i32
  }
}

</mosaic_0001>

<llo_original>
// kernel: custom-call
$region0: #{custom-call}
  %s0 = inlined_call_operand.vmem [shape: bf16[2,64,64], index: 0, kind: output, shape index: {}]

// kernel: glimpse_net_forward.1
$region0: #{glimpse_net_forward.1}
  #allocation0 [shape = 'u32[]', space=smem, size = 0x4, offset = 0x4, fixed_abs, tag = 'smem constant byte address 0x4 - core index']
  #allocation1 [shape = 'u32[144,128]{1,0:T(1,128)}', space=vmem, size = 0x12000, scoped, tag = 'internal scratch']
  %s0 = inlined_call_operand.vmem [shape: bf16[8,4096], index: 0, kind: input, shape index: {}]
  %s1 = inlined_call_operand.vmem [shape: f32[8,2], index: 1, kind: input, shape index: {}]
  %s2 = inlined_call_operand.vmem [shape: bf16[4096,128], index: 2, kind: input, shape index: {}]
  %s3 = inlined_call_operand.vmem [shape: f32[1,128], index: 3, kind: input, shape index: {}]
  %s4 = inlined_call_operand.vmem [shape: f32[2,128], index: 4, kind: input, shape index: {}]
  %s5 = inlined_call_operand.vmem [shape: f32[1,128], index: 5, kind: input, shape index: {}]
  %s6 = inlined_call_operand.vmem [shape: bf16[128,128], index: 6, kind: input, shape index: {}]
  %s7 = inlined_call_operand.vmem [shape: bf16[128,128], index: 7, kind: input, shape index: {}]
  %s8 = inlined_call_operand.vmem [shape: f32[1,128], index: 8, kind: input, shape index: {}]
  %s9 = inlined_call_operand.vmem [shape: f32[8,128], index: 9, kind: output, shape index: {}]
  %s10 = sld [smem:[#allocation0]]
  $region46: #{glimpse_net_forward.1} parent=0
    _
  %s12 = ssub.s32 1, %s10
  %s13 = scalar_select 0, %s12, %s10
  // Predicated region
  $region2: #{glimpse_net_forward.1} parent=0 // pred_check
    _
  $region3: #{glimpse_net_forward.1} parent=0 // pred_check_branch
    %15 = sbr.rel (0) target = $region5
  $region4: #{glimpse_net_forward.1} parent=0 // pred_region
    _
  $region5: #{glimpse_net_forward.1} parent=0 // pred_fallthru
    _
  // Predicated region
  $region6: #{glimpse_net_forward.1} parent=0 // pred_check
    _
  $region7: #{glimpse_net_forward.1} parent=0 // pred_check_branch
    %17 = sbr.rel (0) target = $region9
  $region8: #{glimpse_net_forward.1} parent=0 // pred_region
    _
  $region9: #{glimpse_net_forward.1} parent=0 // pred_fallthru
    _
  // Predicated region
  $region10: #{glimpse_net_forward.1} parent=0 // pred_check
    _
  $region11: #{glimpse_net_forward.1} parent=0 // pred_check_branch
    %19 = sbr.rel (0) target = $region13
  $region12: #{glimpse_net_forward.1} parent=0 // pred_region
    _
  $region13: #{glimpse_net_forward.1} parent=0 // pred_fallthru
    _
  // Predicated region
  $region14: #{glimpse_net_forward.1} parent=0 // pred_check
    _
  $region15: #{glimpse_net_forward.1} parent=0 // pred_check_branch
    %21 = sbr.rel (0) target = $region17
  $region16: #{glimpse_net_forward.1} parent=0 // pred_region
    _
  $region17: #{glimpse_net_forward.1} parent=0 // pred_fallthru
    _
  // Predicated region
  $region18: #{glimpse_net_forward.1} parent=0 // pred_check
    _
  $region19: #{glimpse_net_forward.1} parent=0 // pred_check_branch
    %23 = sbr.rel (0) target = $region21
  $region20: #{glimpse_net_forward.1} parent=0 // pred_region
    _
  $region21: #{glimpse_net_forward.1} parent=0 // pred_fallthru
    _
  // Predicated region
  $region22: #{glimpse_net_forward.1} parent=0 // pred_check
    _
  $region23: #{glimpse_net_forward.1} parent=0 // pred_check_branch
    %25 = sbr.rel (0) target = $region25
  $region24: #{glimpse_net_forward.1} parent=0 // pred_region
    _
  $region25: #{glimpse_net_forward.1} parent=0 // pred_fallthru
    _
  // Predicated region
  $region26: #{glimpse_net_forward.1} parent=0 // pred_check
    _
  $region27: #{glimpse_net_forward.1} parent=0 // pred_check_branch
    %27 = sbr.rel (0) target = $region29
  $region28: #{glimpse_net_forward.1} parent=0 // pred_region
    _
  $region29: #{glimpse_net_forward.1} parent=0 // pred_fallthru
    _
  // Predicated region
  $region30: #{glimpse_net_forward.1} parent=0 // pred_check
    _
  $region31: #{glimpse_net_forward.1} parent=0 // pred_check_branch
    %29 = sbr.rel (0) target = $region33
  $region32: #{glimpse_net_forward.1} parent=0 // pred_region
    _
  $region33: #{glimpse_net_forward.1} parent=0 // pred_fallthru
    _
  // Predicated region
  $region34: #{glimpse_net_forward.1} parent=0 // pred_check
    _
  $region35: #{glimpse_net_forward.1} parent=0 // pred_check_branch
    %31 = sbr.rel (0) target = $region37
  $region36: #{glimpse_net_forward.1} parent=0 // pred_region
    _
  $region37: #{glimpse_net_forward.1} parent=0 // pred_fallthru
    _
  %v33 = vld [vmem:[%s0] sm:$0xff]
  %v34 = vld [vmem:[%s0 + $0x8] sm:$0xff]
  %v35 = vld [vmem:[%s0 + $0x10] sm:$0xff]
  %v36 = vld [vmem:[%s0 + $0x18] sm:$0xff]
  %v37 = vld [vmem:[%s0 + $0x20] sm:$0xff]
  %v38 = vld [vmem:[%s0 + $0x28] sm:$0xff]
  %v39 = vld [vmem:[%s0 + $0x30] sm:$0xff]
  %v40 = vld [vmem:[%s0 + $0x38] sm:$0xff]
  %v41 = vld [vmem:[%s0 + $0x40] sm:$0xff]
  %v42 = vld [vmem:[%s0 + $0x48] sm:$0xff]
  %v43 = vld [vmem:[%s0 + $0x50] sm:$0xff]
  %v44 = vld [vmem:[%s0 + $0x58] sm:$0xff]
  %v45 = vld [vmem:[%s0 + $0x60] sm:$0xff]
  %v46 = vld [vmem:[%s0 + $0x68] sm:$0xff]
  %v47 = vld [vmem:[%s0 + $0x70] sm:$0xff]
  %v48 = vld [vmem:[%s0 + $0x78] sm:$0xff]
  %v49 = vld [vmem:[%s2] sm:$0xf]
  %v50 = vld [vmem:[%s2 + $0x4] sm:$0xf]
  %v51 = vld [vmem:[%s2 + $0x8] sm:$0xf]
  %v52 = vld [vmem:[%s2 + $0xc] sm:$0xf]
  %v53 = vld [vmem:[%s2 + $0x10] sm:$0xf]
  %v54 = vld [vmem:[%s2 + $0x14] sm:$0xf]
  %v55 = vld [vmem:[%s2 + $0x18] sm:$0xf]
  %v56 = vld [vmem:[%s2 + $0x1c] sm:$0xf]
  %v57 = vld [vmem:[%s2 + $0x20] sm:$0xf]
  %v58 = vld [vmem:[%s2 + $0x24] sm:$0xf]
  %v59 = vld [vmem:[%s2 + $0x28] sm:$0xf]
  %v60 = vld [vmem:[%s2 + $0x2c] sm:$0xf]
  %v61 = vld [vmem:[%s2 + $0x30] sm:$0xf]
  %v62 = vld [vmem:[%s2 + $0x34] sm:$0xf]
  %v63 = vld [vmem:[%s2 + $0x38] sm:$0xf]
  %v64 = vld [vmem:[%s2 + $0x3c] sm:$0xf]
  %v65 = vld [vmem:[%s2 + $0x40] sm:$0xf]
  %v66 = vld [vmem:[%s2 + $0x44] sm:$0xf]
  %v67 = vld [vmem:[%s2 + $0x48] sm:$0xf]
  %v68 = vld [vmem:[%s2 + $0x4c] sm:$0xf]
  %v69 = vld [vmem:[%s2 + $0x50] sm:$0xf]
  %v70 = vld [vmem:[%s2 + $0x54] sm:$0xf]
  %v71 = vld [vmem:[%s2 + $0x58] sm:$0xf]
  %v72 = vld [vmem:[%s2 + $0x5c] sm:$0xf]
  %v73 = vld [vmem:[%s2 + $0x60] sm:$0xf]
  %v74 = vld [vmem:[%s2 + $0x64] sm:$0xf]
  %v75 = vld [vmem:[%s2 + $0x68] sm:$0xf]
  %v76 = vld [vmem:[%s2 + $0x6c] sm:$0xf]
  %v77 = vld [vmem:[%s2 + $0x70] sm:$0xf]
  %v78 = vld [vmem:[%s2 + $0x74] sm:$0xf]
  %v79 = vld [vmem:[%s2 + $0x78] sm:$0xf]
  %v80 = vld [vmem:[%s2 + $0x7c] sm:$0xf]
  %v81 = vld [vmem:[%s2 + $0x80] sm:$0xf]
  %v82 = vld [vmem:[%s2 + $0x84] sm:$0xf]
  %v83 = vld [vmem:[%s2 + $0x88] sm:$0xf]
  %v84 = vld [vmem:[%s2 + $0x8c] sm:$0xf]
  %v85 = vld [vmem:[%s2 + $0x90] sm:$0xf]
  %v86 = vld [vmem:[%s2 + $0x94] sm:$0xf]
  %v87 = vld [vmem:[%s2 + $0x98] sm:$0xf]
  %v88 = vld [vmem:[%s2 + $0x9c] sm:$0xf]
  %v89 = vld [vmem:[%s2 + $0xa0] sm:$0xf]
  %v90 = vld [vmem:[%s2 + $0xa4] sm:$0xf]
  %v91 = vld [vmem:[%s2 + $0xa8] sm:$0xf]
  %v92 = vld [vmem:[%s2 + $0xac] sm:$0xf]
  %v93 = vld [vmem:[%s2 + $0xb0] sm:$0xf]
  %v94 = vld [vmem:[%s2 + $0xb4] sm:$0xf]
  %v95 = vld [vmem:[%s2 + $0xb8] sm:$0xf]
  %v96 = vld [vmem:[%s2 + $0xbc] sm:$0xf]
  %v97 = vld [vmem:[%s2 + $0xc0] sm:$0xf]
  %v98 = vld [vmem:[%s2 + $0xc4] sm:$0xf]
  %v99 = vld [vmem:[%s2 + $0xc8] sm:$0xf]
  %v100 = vld [vmem:[%s2 + $0xcc] sm:$0xf]
  %v101 = vld [vmem:[%s2 + $0xd0] sm:$0xf]
  %v102 = vld [vmem:[%s2 + $0xd4] sm:$0xf]
  %v103 = vld [vmem:[%s2 + $0xd8] sm:$0xf]
  %v104 = vld [vmem:[%s2 + $0xdc] sm:$0xf]
  %v105 = vld [vmem:[%s2 + $0xe0] sm:$0xf]
  %v106 = vld [vmem:[%s2 + $0xe4] sm:$0xf]
  %v107 = vld [vmem:[%s2 + $0xe8] sm:$0xf]
  %v108 = vld [vmem:[%s2 + $0xec] sm:$0xf]
  %v109 = vld [vmem:[%s2 + $0xf0] sm:$0xf]
  %v110 = vld [vmem:[%s2 + $0xf4] sm:$0xf]
  %v111 = vld [vmem:[%s2 + $0xf8] sm:$0xf]
  %v112 = vld [vmem:[%s2 + $0xfc] sm:$0xf]
  %v113 = vld [vmem:[%s2 + $0x100] sm:$0xf]
  %v114 = vld [vmem:[%s2 + $0x104] sm:$0xf]
  %v115 = vld [vmem:[%s2 + $0x108] sm:$0xf]
  %v116 = vld [vmem:[%s2 + $0x10c] sm:$0xf]
  %v117 = vld [vmem:[%s2 + $0x110] sm:$0xf]
  %v118 = vld [vmem:[%s2 + $0x114] sm:$0xf]
  %v119 = vld [vmem:[%s2 + $0x118] sm:$0xf]
  %v120 = vld [vmem:[%s2 + $0x11c] sm:$0xf]
  %v121 = vld [vmem:[%s2 + $0x120] sm:$0xf]
  %v122 = vld [vmem:[%s2 + $0x124] sm:$0xf]
  %v123 = vld [vmem:[%s2 + $0x128] sm:$0xf]
  %v124 = vld [vmem:[%s2 + $0x12c] sm:$0xf]
  %v125 = vld [vmem:[%s2 + $0x130] sm:$0xf]
  %v126 = vld [vmem:[%s2 + $0x134] sm:$0xf]
  %v127 = vld [vmem:[%s2 + $0x138] sm:$0xf]
  %v128 = vld [vmem:[%s2 + $0x13c] sm:$0xf]
  %v129 = vld [vmem:[%s2 + $0x140] sm:$0xf]
  %v130 = vld [vmem:[%s2 + $0x144] sm:$0xf]
  %v131 = vld [vmem:[%s2 + $0x148] sm:$0xf]
  %v132 = vld [vmem:[%s2 + $0x14c] sm:$0xf]
  %v133 = vld [vmem:[%s2 + $0x150] sm:$0xf]
  %v134 = vld [vmem:[%s2 + $0x154] sm:$0xf]
  %v135 = vld [vmem:[%s2 + $0x158] sm:$0xf]
  %v136 = vld [vmem:[%s2 + $0x15c] sm:$0xf]
  %v137 = vld [vmem:[%s2 + $0x160] sm:$0xf]
  %v138 = vld [vmem:[%s2 + $0x164] sm:$0xf]
  %v139 = vld [vmem:[%s2 + $0x168] sm:$0xf]
  %v140 = vld [vmem:[%s2 + $0x16c] sm:$0xf]
  %v141 = vld [vmem:[%s2 + $0x170] sm:$0xf]
  %v142 = vld [vmem:[%s2 + $0x174] sm:$0xf]
  %v143 = vld [vmem:[%s2 + $0x178] sm:$0xf]
  %v144 = vld [vmem:[%s2 + $0x17c] sm:$0xf]
  %v145 = vld [vmem:[%s2 + $0x180] sm:$0xf]
  %v146 = vld [vmem:[%s2 + $0x184] sm:$0xf]
  %v147 = vld [vmem:[%s2 + $0x188] sm:$0xf]
  %v148 = vld [vmem:[%s2 + $0x18c] sm:$0xf]
  %v149 = vld [vmem:[%s2 + $0x190] sm:$0xf]
  %v150 = vld [vmem:[%s2 + $0x194] sm:$0xf]
  %v151 = vld [vmem:[%s2 + $0x198] sm:$0xf]
  %v152 = vld [vmem:[%s2 + $0x19c] sm:$0xf]
  %v153 = vld [vmem:[%s2 + $0x1a0] sm:$0xf]
  %v154 = vld [vmem:[%s2 + $0x1a4] sm:$0xf]
  %v155 = vld [vmem:[%s2 + $0x1a8] sm:$0xf]
  %v156 = vld [vmem:[%s2 + $0x1ac] sm:$0xf]
  %v157 = vld [vmem:[%s2 + $0x1b0] sm:$0xf]
  %v158 = vld [vmem:[%s2 + $0x1b4] sm:$0xf]
  %v159 = vld [vmem:[%s2 + $0x1b8] sm:$0xf]
  %v160 = vld [vmem:[%s2 + $0x1bc] sm:$0xf]
  %v161 = vld [vmem:[%s2 + $0x1c0] sm:$0xf]
  %v162 = vld [vmem:[%s2 + $0x1c4] sm:$0xf]
  %v163 = vld [vmem:[%s2 + $0x1c8] sm:$0xf]
  %v164 = vld [vmem:[%s2 + $0x1cc] sm:$0xf]
  %v165 = vld [vmem:[%s2 + $0x1d0] sm:$0xf]
  %v166 = vld [vmem:[%s2 + $0x1d4] sm:$0xf]
  %v167 = vld [vmem:[%s2 + $0x1d8] sm:$0xf]
  %v168 = vld [vmem:[%s2 + $0x1dc] sm:$0xf]
  %v169 = vld [vmem:[%s2 + $0x1e0] sm:$0xf]
  %v170 = vld [vmem:[%s2 + $0x1e4] sm:$0xf]
  %v171 = vld [vmem:[%s2 + $0x1e8] sm:$0xf]
  %v172 = vld [vmem:[%s2 + $0x1ec] sm:$0xf]
  %v173 = vld [vmem:[%s2 + $0x1f0] sm:$0xf]
  %v174 = vld [vmem:[%s2 + $0x1f4] sm:$0xf]
  %v175 = vld [vmem:[%s2 + $0x1f8] sm:$0xf]
  %v176 = vld [vmem:[%s2 + $0x1fc] sm:$0xf]
  %v177 = vld [vmem:[%s2 + $0x200] sm:$0xf]
  %v178 = vld [vmem:[%s2 + $0x204] sm:$0xf]
  %v179 = vld [vmem:[%s2 + $0x208] sm:$0xf]
  %v180 = vld [vmem:[%s2 + $0x20c] sm:$0xf]
  %v181 = vld [vmem:[%s2 + $0x210] sm:$0xf]
  %v182 = vld [vmem:[%s2 + $0x214] sm:$0xf]
  %v183 = vld [vmem:[%s2 + $0x218] sm:$0xf]
  %v184 = vld [vmem:[%s2 + $0x21c] sm:$0xf]
  %v185 = vld [vmem:[%s2 + $0x220] sm:$0xf]
  %v186 = vld [vmem:[%s2 + $0x224] sm:$0xf]
  %v187 = vld [vmem:[%s2 + $0x228] sm:$0xf]
  %v188 = vld [vmem:[%s2 + $0x22c] sm:$0xf]
  %v189 = vld [vmem:[%s2 + $0x230] sm:$0xf]
  %v190 = vld [vmem:[%s2 + $0x234] sm:$0xf]
  %v191 = vld [vmem:[%s2 + $0x238] sm:$0xf]
  %v192 = vld [vmem:[%s2 + $0x23c] sm:$0xf]
  %v193 = vld [vmem:[%s2 + $0x240] sm:$0xf]
  %v194 = vld [vmem:[%s2 + $0x244] sm:$0xf]
  %v195 = vld [vmem:[%s2 + $0x248] sm:$0xf]
  %v196 = vld [vmem:[%s2 + $0x24c] sm:$0xf]
  %v197 = vld [vmem:[%s2 + $0x250] sm:$0xf]
  %v198 = vld [vmem:[%s2 + $0x254] sm:$0xf]
  %v199 = vld [vmem:[%s2 + $0x258] sm:$0xf]
  %v200 = vld [vmem:[%s2 + $0x25c] sm:$0xf]
  %v201 = vld [vmem:[%s2 + $0x260] sm:$0xf]
  %v202 = vld [vmem:[%s2 + $0x264] sm:$0xf]
  %v203 = vld [vmem:[%s2 + $0x268] sm:$0xf]
  %v204 = vld [vmem:[%s2 + $0x26c] sm:$0xf]
  %v205 = vld [vmem:[%s2 + $0x270] sm:$0xf]
  %v206 = vld [vmem:[%s2 + $0x274] sm:$0xf]
  %v207 = vld [vmem:[%s2 + $0x278] sm:$0xf]
  %v208 = vld [vmem:[%s2 + $0x27c] sm:$0xf]
  %v209 = vld [vmem:[%s2 + $0x280] sm:$0xf]
  %v210 = vld [vmem:[%s2 + $0x284] sm:$0xf]
  %v211 = vld [vmem:[%s2 + $0x288] sm:$0xf]
  %v212 = vld [vmem:[%s2 + $0x28c] sm:$0xf]
  %v213 = vld [vmem:[%s2 + $0x290] sm:$0xf]
  %v214 = vld [vmem:[%s2 + $0x294] sm:$0xf]
  %v215 = vld [vmem:[%s2 + $0x298] sm:$0xf]
  %v216 = vld [vmem:[%s2 + $0x29c] sm:$0xf]
  %v217 = vld [vmem:[%s2 + $0x2a0] sm:$0xf]
  %v218 = vld [vmem:[%s2 + $0x2a4] sm:$0xf]
  %v219 = vld [vmem:[%s2 + $0x2a8] sm:$0xf]
  %v220 = vld [vmem:[%s2 + $0x2ac] sm:$0xf]
  %v221 = vld [vmem:[%s2 + $0x2b0] sm:$0xf]
  %v222 = vld [vmem:[%s2 + $0x2b4] sm:$0xf]
  %v223 = vld [vmem:[%s2 + $0x2b8] sm:$0xf]
  %v224 = vld [vmem:[%s2 + $0x2bc] sm:$0xf]
  %v225 = vld [vmem:[%s2 + $0x2c0] sm:$0xf]
  %v226 = vld [vmem:[%s2 + $0x2c4] sm:$0xf]
  %v227 = vld [vmem:[%s2 + $0x2c8] sm:$0xf]
  %v228 = vld [vmem:[%s2 + $0x2cc] sm:$0xf]
  %v229 = vld [vmem:[%s2 + $0x2d0] sm:$0xf]
  %v230 = vld [vmem:[%s2 + $0x2d4] sm:$0xf]
  %v231 = vld [vmem:[%s2 + $0x2d8] sm:$0xf]
  %v232 = vld [vmem:[%s2 + $0x2dc] sm:$0xf]
  %v233 = vld [vmem:[%s2 + $0x2e0] sm:$0xf]
  %v234 = vld [vmem:[%s2 + $0x2e4] sm:$0xf]
  %v235 = vld [vmem:[%s2 + $0x2e8] sm:$0xf]
  %v236 = vld [vmem:[%s2 + $0x2ec] sm:$0xf]
  %v237 = vld [vmem:[%s2 + $0x2f0] sm:$0xf]
  %v238 = vld [vmem:[%s2 + $0x2f4] sm:$0xf]
  %v239 = vld [vmem:[%s2 + $0x2f8] sm:$0xf]
  %v240 = vld [vmem:[%s2 + $0x2fc] sm:$0xf]
  %v241 = vld [vmem:[%s2 + $0x300] sm:$0xf]
  %v242 = vld [vmem:[%s2 + $0x304] sm:$0xf]
  %v243 = vld [vmem:[%s2 + $0x308] sm:$0xf]
  %v244 = vld [vmem:[%s2 + $0x30c] sm:$0xf]
  %v245 = vld [vmem:[%s2 + $0x310] sm:$0xf]
  %v246 = vld [vmem:[%s2 + $0x314] sm:$0xf]
  %v247 = vld [vmem:[%s2 + $0x318] sm:$0xf]
  %v248 = vld [vmem:[%s2 + $0x31c] sm:$0xf]
  %v249 = vld [vmem:[%s2 + $0x320] sm:$0xf]
  %v250 = vld [vmem:[%s2 + $0x324] sm:$0xf]
  %v251 = vld [vmem:[%s2 + $0x328] sm:$0xf]
  %v252 = vld [vmem:[%s2 + $0x32c] sm:$0xf]
  %v253 = vld [vmem:[%s2 + $0x330] sm:$0xf]
  %v254 = vld [vmem:[%s2 + $0x334] sm:$0xf]
  %v255 = vld [vmem:[%s2 + $0x338] sm:$0xf]
  %v256 = vld [vmem:[%s2 + $0x33c] sm:$0xf]
  %v257 = vld [vmem:[%s2 + $0x340] sm:$0xf]
  %v258 = vld [vmem:[%s2 + $0x344] sm:$0xf]
  %v259 = vld [vmem:[%s2 + $0x348] sm:$0xf]
  %v260 = vld [vmem:[%s2 + $0x34c] sm:$0xf]
  %v261 = vld [vmem:[%s2 + $0x350] sm:$0xf]
  %v262 = vld [vmem:[%s2 + $0x354] sm:$0xf]
  %v263 = vld [vmem:[%s2 + $0x358] sm:$0xf]
  %v264 = vld [vmem:[%s2 + $0x35c] sm:$0xf]
  %v265 = vld [vmem:[%s2 + $0x360] sm:$0xf]
  %v266 = vld [vmem:[%s2 + $0x364] sm:$0xf]
  %v267 = vld [vmem:[%s2 + $0x368] sm:$0xf]
  %v268 = vld [vmem:[%s2 + $0x36c] sm:$0xf]
  %v269 = vld [vmem:[%s2 + $0x370] sm:$0xf]
  %v270 = vld [vmem:[%s2 + $0x374] sm:$0xf]
  %v271 = vld [vmem:[%s2 + $0x378] sm:$0xf]
  %v272 = vld [vmem:[%s2 + $0x37c] sm:$0xf]
  %v273 = vld [vmem:[%s2 + $0x380] sm:$0xf]
  %v274 = vld [vmem:[%s2 + $0x384] sm:$0xf]
  %v275 = vld [vmem:[%s2 + $0x388] sm:$0xf]
  %v276 = vld [vmem:[%s2 + $0x38c] sm:$0xf]
  %v277 = vld [vmem:[%s2 + $0x390] sm:$0xf]
  %v278 = vld [vmem:[%s2 + $0x394] sm:$0xf]
  %v279 = vld [vmem:[%s2 + $0x398] sm:$0xf]
  %v280 = vld [vmem:[%s2 + $0x39c] sm:$0xf]
  %v281 = vld [vmem:[%s2 + $0x3a0] sm:$0xf]
  %v282 = vld [vmem:[%s2 + $0x3a4] sm:$0xf]
  %v283 = vld [vmem:[%s2 + $0x3a8] sm:$0xf]
  %v284 = vld [vmem:[%s2 + $0x3ac] sm:$0xf]
  %v285 = vld [vmem:[%s2 + $0x3b0] sm:$0xf]
  %v286 = vld [vmem:[%s2 + $0x3b4] sm:$0xf]
  %v287 = vld [vmem:[%s2 + $0x3b8] sm:$0xf]
  %v288 = vld [vmem:[%s2 + $0x3bc] sm:$0xf]
  %v289 = vld [vmem:[%s2 + $0x3c0] sm:$0xf]
  %v290 = vld [vmem:[%s2 + $0x3c4] sm:$0xf]
  %v291 = vld [vmem:[%s2 + $0x3c8] sm:$0xf]
  %v292 = vld [vmem:[%s2 + $0x3cc] sm:$0xf]
  %v293 = vld [vmem:[%s2 + $0x3d0] sm:$0xf]
  %v294 = vld [vmem:[%s2 + $0x3d4] sm:$0xf]
  %v295 = vld [vmem:[%s2 + $0x3d8] sm:$0xf]
  %v296 = vld [vmem:[%s2 + $0x3dc] sm:$0xf]
  %v297 = vld [vmem:[%s2 + $0x3e0] sm:$0xf]
  %v298 = vld [vmem:[%s2 + $0x3e4] sm:$0xf]
  %v299 = vld [vmem:[%s2 + $0x3e8] sm:$0xf]
  %v300 = vld [vmem:[%s2 + $0x3ec] sm:$0xf]
  %v301 = vld [vmem:[%s2 + $0x3f0] sm:$0xf]
  %v302 = vld [vmem:[%s2 + $0x3f4] sm:$0xf]
  %v303 = vld [vmem:[%s2 + $0x3f8] sm:$0xf]
  %v304 = vld [vmem:[%s2 + $0x3fc] sm:$0xf]
  %v305 = vld [vmem:[%s2 + $0x400] sm:$0xf]
  %v306 = vld [vmem:[%s2 + $0x404] sm:$0xf]
  %v307 = vld [vmem:[%s2 + $0x408] sm:$0xf]
  %v308 = vld [vmem:[%s2 + $0x40c] sm:$0xf]
  %v309 = vld [vmem:[%s2 + $0x410] sm:$0xf]
  %v310 = vld [vmem:[%s2 + $0x414] sm:$0xf]
  %v311 = vld [vmem:[%s2 + $0x418] sm:$0xf]
  %v312 = vld [vmem:[%s2 + $0x41c] sm:$0xf]
  %v313 = vld [vmem:[%s2 + $0x420] sm:$0xf]
  %v314 = vld [vmem:[%s2 + $0x424] sm:$0xf]
  %v315 = vld [vmem:[%s2 + $0x428] sm:$0xf]
  %v316 = vld [vmem:[%s2 + $0x42c] sm:$0xf]
  %v317 = vld [vmem:[%s2 + $0x430] sm:$0xf]
  %v318 = vld [vmem:[%s2 + $0x434] sm:$0xf]
  %v319 = vld [vmem:[%s2 + $0x438] sm:$0xf]
  %v320 = vld [vmem:[%s2 + $0x43c] sm:$0xf]
  %v321 = vld [vmem:[%s2 + $0x440] sm:$0xf]
  %v322 = vld [vmem:[%s2 + $0x444] sm:$0xf]
  %v323 = vld [vmem:[%s2 + $0x448] sm:$0xf]
  %v324 = vld [vmem:[%s2 + $0x44c] sm:$0xf]
  %v325 = vld [vmem:[%s2 + $0x450] sm:$0xf]
  %v326 = vld [vmem:[%s2 + $0x454] sm:$0xf]
  %v327 = vld [vmem:[%s2 + $0x458] sm:$0xf]
  %v328 = vld [vmem:[%s2 + $0x45c] sm:$0xf]
  %v329 = vld [vmem:[%s2 + $0x460] sm:$0xf]
  %v330 = vld [vmem:[%s2 + $0x464] sm:$0xf]
  %v331 = vld [vmem:[%s2 + $0x468] sm:$0xf]
  %v332 = vld [vmem:[%s2 + $0x46c] sm:$0xf]
  %v333 = vld [vmem:[%s2 + $0x470] sm:$0xf]
  %v334 = vld [vmem:[%s2 + $0x474] sm:$0xf]
  %v335 = vld [vmem:[%s2 + $0x478] sm:$0xf]
  %v336 = vld [vmem:[%s2 + $0x47c] sm:$0xf]
  %v337 = vld [vmem:[%s2 + $0x480] sm:$0xf]
  %v338 = vld [vmem:[%s2 + $0x484] sm:$0xf]
  %v339 = vld [vmem:[%s2 + $0x488] sm:$0xf]
  %v340 = vld [vmem:[%s2 + $0x48c] sm:$0xf]
  %v341 = vld [vmem:[%s2 + $0x490] sm:$0xf]
  %v342 = vld [vmem:[%s2 + $0x494] sm:$0xf]
  %v343 = vld [vmem:[%s2 + $0x498] sm:$0xf]
  %v344 = vld [vmem:[%s2 + $0x49c] sm:$0xf]
  %v345 = vld [vmem:[%s2 + $0x4a0] sm:$0xf]
  %v346 = vld [vmem:[%s2 + $0x4a4] sm:$0xf]
  %v347 = vld [vmem:[%s2 + $0x4a8] sm:$0xf]
  %v348 = vld [vmem:[%s2 + $0x4ac] sm:$0xf]
  %v349 = vld [vmem:[%s2 + $0x4b0] sm:$0xf]
  %v350 = vld [vmem:[%s2 + $0x4b4] sm:$0xf]
  %v351 = vld [vmem:[%s2 + $0x4b8] sm:$0xf]
  %v352 = vld [vmem:[%s2 + $0x4bc] sm:$0xf]
  %v353 = vld [vmem:[%s2 + $0x4c0] sm:$0xf]
  %v354 = vld [vmem:[%s2 + $0x4c4] sm:$0xf]
  %v355 = vld [vmem:[%s2 + $0x4c8] sm:$0xf]
  %v356 = vld [vmem:[%s2 + $0x4cc] sm:$0xf]
  %v357 = vld [vmem:[%s2 + $0x4d0] sm:$0xf]
  %v358 = vld [vmem:[%s2 + $0x4d4] sm:$0xf]
  %v359 = vld [vmem:[%s2 + $0x4d8] sm:$0xf]
  %v360 = vld [vmem:[%s2 + $0x4dc] sm:$0xf]
  %v361 = vld [vmem:[%s2 + $0x4e0] sm:$0xf]
  %v362 = vld [vmem:[%s2 + $0x4e4] sm:$0xf]
  %v363 = vld [vmem:[%s2 + $0x4e8] sm:$0xf]
  %v364 = vld [vmem:[%s2 + $0x4ec] sm:$0xf]
  %v365 = vld [vmem:[%s2 + $0x4f0] sm:$0xf]
  %v366 = vld [vmem:[%s2 + $0x4f4] sm:$0xf]
  %v367 = vld [vmem:[%s2 + $0x4f8] sm:$0xf]
  %v368 = vld [vmem:[%s2 + $0x4fc] sm:$0xf]
  %v369 = vld [vmem:[%s2 + $0x500] sm:$0xf]
  %v370 = vld [vmem:[%s2 + $0x504] sm:$0xf]
  %v371 = vld [vmem:[%s2 + $0x508] sm:$0xf]
  %v372 = vld [vmem:[%s2 + $0x50c] sm:$0xf]
  %v373 = vld [vmem:[%s2 + $0x510] sm:$0xf]
  %v374 = vld [vmem:[%s2 + $0x514] sm:$0xf]
  %v375 = vld [vmem:[%s2 + $0x518] sm:$0xf]
  %v376 = vld [vmem:[%s2 + $0x51c] sm:$0xf]
  %v377 = vld [vmem:[%s2 + $0x520] sm:$0xf]
  %v378 = vld [vmem:[%s2 + $0x524] sm:$0xf]
  %v379 = vld [vmem:[%s2 + $0x528] sm:$0xf]
  %v380 = vld [vmem:[%s2 + $0x52c] sm:$0xf]
  %v381 = vld [vmem:[%s2 + $0x530] sm:$0xf]
  %v382 = vld [vmem:[%s2 + $0x534] sm:$0xf]
  %v383 = vld [vmem:[%s2 + $0x538] sm:$0xf]
  %v384 = vld [vmem:[%s2 + $0x53c] sm:$0xf]
  %v385 = vld [vmem:[%s2 + $0x540] sm:$0xf]
  %v386 = vld [vmem:[%s2 + $0x544] sm:$0xf]
  %v387 = vld [vmem:[%s2 + $0x548] sm:$0xf]
  %v388 = vld [vmem:[%s2 + $0x54c] sm:$0xf]
  %v389 = vld [vmem:[%s2 + $0x550] sm:$0xf]
  %v390 = vld [vmem:[%s2 + $0x554] sm:$0xf]
  %v391 = vld [vmem:[%s2 + $0x558] sm:$0xf]
  %v392 = vld [vmem:[%s2 + $0x55c] sm:$0xf]
  %v393 = vld [vmem:[%s2 + $0x560] sm:$0xf]
  %v394 = vld [vmem:[%s2 + $0x564] sm:$0xf]
  %v395 = vld [vmem:[%s2 + $0x568] sm:$0xf]
  %v396 = vld [vmem:[%s2 + $0x56c] sm:$0xf]
  %v397 = vld [vmem:[%s2 + $0x570] sm:$0xf]
  %v398 = vld [vmem:[%s2 + $0x574] sm:$0xf]
  %v399 = vld [vmem:[%s2 + $0x578] sm:$0xf]
  %v400 = vld [vmem:[%s2 + $0x57c] sm:$0xf]
  %v401 = vld [vmem:[%s2 + $0x580] sm:$0xf]
  %v402 = vld [vmem:[%s2 + $0x584] sm:$0xf]
  %v403 = vld [vmem:[%s2 + $0x588] sm:$0xf]
  %v404 = vld [vmem:[%s2 + $0x58c] sm:$0xf]
  %v405 = vld [vmem:[%s2 + $0x590] sm:$0xf]
  %v406 = vld [vmem:[%s2 + $0x594] sm:$0xf]
  %v407 = vld [vmem:[%s2 + $0x598] sm:$0xf]
  %v408 = vld [vmem:[%s2 + $0x59c] sm:$0xf]
  %v409 = vld [vmem:[%s2 + $0x5a0] sm:$0xf]
  %v410 = vld [vmem:[%s2 + $0x5a4] sm:$0xf]
  %v411 = vld [vmem:[%s2 + $0x5a8] sm:$0xf]
  %v412 = vld [vmem:[%s2 + $0x5ac] sm:$0xf]
  %v413 = vld [vmem:[%s2 + $0x5b0] sm:$0xf]
  %v414 = vld [vmem:[%s2 + $0x5b4] sm:$0xf]
  %v415 = vld [vmem:[%s2 + $0x5b8] sm:$0xf]
  %v416 = vld [vmem:[%s2 + $0x5bc] sm:$0xf]
  %v417 = vld [vmem:[%s2 + $0x5c0] sm:$0xf]
  %v418 = vld [vmem:[%s2 + $0x5c4] sm:$0xf]
  %v419 = vld [vmem:[%s2 + $0x5c8] sm:$0xf]
  %v420 = vld [vmem:[%s2 + $0x5cc] sm:$0xf]
  %v421 = vld [vmem:[%s2 + $0x5d0] sm:$0xf]
  %v422 = vld [vmem:[%s2 + $0x5d4] sm:$0xf]
  %v423 = vld [vmem:[%s2 + $0x5d8] sm:$0xf]
  %v424 = vld [vmem:[%s2 + $0x5dc] sm:$0xf]
  %v425 = vld [vmem:[%s2 + $0x5e0] sm:$0xf]
  %v426 = vld [vmem:[%s2 + $0x5e4] sm:$0xf]
  %v427 = vld [vmem:[%s2 + $0x5e8] sm:$0xf]
  %v428 = vld [vmem:[%s2 + $0x5ec] sm:$0xf]
  %v429 = vld [vmem:[%s2 + $0x5f0] sm:$0xf]
  %v430 = vld [vmem:[%s2 + $0x5f4] sm:$0xf]
  %v431 = vld [vmem:[%s2 + $0x5f8] sm:$0xf]
  %v432 = vld [vmem:[%s2 + $0x5fc] sm:$0xf]
  %v433 = vld [vmem:[%s2 + $0x600] sm:$0xf]
  %v434 = vld [vmem:[%s2 + $0x604] sm:$0xf]
  %v435 = vld [vmem:[%s2 + $0x608] sm:$0xf]
  %v436 = vld [vmem:[%s2 + $0x60c] sm:$0xf]
  %v437 = vld [vmem:[%s2 + $0x610] sm:$0xf]
  %v438 = vld [vmem:[%s2 + $0x614] sm:$0xf]
  %v439 = vld [vmem:[%s2 + $0x618] sm:$0xf]
  %v440 = vld [vmem:[%s2 + $0x61c] sm:$0xf]
  %v441 = vld [vmem:[%s2 + $0x620] sm:$0xf]
  %v442 = vld [vmem:[%s2 + $0x624] sm:$0xf]
  %v443 = vld [vmem:[%s2 + $0x628] sm:$0xf]
  %v444 = vld [vmem:[%s2 + $0x62c] sm:$0xf]
  %v445 = vld [vmem:[%s2 + $0x630] sm:$0xf]
  %v446 = vld [vmem:[%s2 + $0x634] sm:$0xf]
  %v447 = vld [vmem:[%s2 + $0x638] sm:$0xf]
  %v448 = vld [vmem:[%s2 + $0x63c] sm:$0xf]
  %v449 = vld [vmem:[%s2 + $0x640] sm:$0xf]
  %v450 = vld [vmem:[%s2 + $0x644] sm:$0xf]
  %v451 = vld [vmem:[%s2 + $0x648] sm:$0xf]
  %v452 = vld [vmem:[%s2 + $0x64c] sm:$0xf]
  %v453 = vld [vmem:[%s2 + $0x650] sm:$0xf]
  %v454 = vld [vmem:[%s2 + $0x654] sm:$0xf]
  %v455 = vld [vmem:[%s2 + $0x658] sm:$0xf]
  %v456 = vld [vmem:[%s2 + $0x65c] sm:$0xf]
  %v457 = vld [vmem:[%s2 + $0x660] sm:$0xf]
  %v458 = vld [vmem:[%s2 + $0x664] sm:$0xf]
  %v459 = vld [vmem:[%s2 + $0x668] sm:$0xf]
  %v460 = vld [vmem:[%s2 + $0x66c] sm:$0xf]
  %v461 = vld [vmem:[%s2 + $0x670] sm:$0xf]
  %v462 = vld [vmem:[%s2 + $0x674] sm:$0xf]
  %v463 = vld [vmem:[%s2 + $0x678] sm:$0xf]
  %v464 = vld [vmem:[%s2 + $0x67c] sm:$0xf]
  %v465 = vld [vmem:[%s2 + $0x680] sm:$0xf]
  %v466 = vld [vmem:[%s2 + $0x684] sm:$0xf]
  %v467 = vld [vmem:[%s2 + $0x688] sm:$0xf]
  %v468 = vld [vmem:[%s2 + $0x68c] sm:$0xf]
  %v469 = vld [vmem:[%s2 + $0x690] sm:$0xf]
  %v470 = vld [vmem:[%s2 + $0x694] sm:$0xf]
  %v471 = vld [vmem:[%s2 + $0x698] sm:$0xf]
  %v472 = vld [vmem:[%s2 + $0x69c] sm:$0xf]
  %v473 = vld [vmem:[%s2 + $0x6a0] sm:$0xf]
  %v474 = vld [vmem:[%s2 + $0x6a4] sm:$0xf]
  %v475 = vld [vmem:[%s2 + $0x6a8] sm:$0xf]
  %v476 = vld [vmem:[%s2 + $0x6ac] sm:$0xf]
  %v477 = vld [vmem:[%s2 + $0x6b0] sm:$0xf]
  %v478 = vld [vmem:[%s2 + $0x6b4] sm:$0xf]
  %v479 = vld [vmem:[%s2 + $0x6b8] sm:$0xf]
  %v480 = vld [vmem:[%s2 + $0x6bc] sm:$0xf]
  %v481 = vld [vmem:[%s2 + $0x6c0] sm:$0xf]
  %v482 = vld [vmem:[%s2 + $0x6c4] sm:$0xf]
  %v483 = vld [vmem:[%s2 + $0x6c8] sm:$0xf]
  %v484 = vld [vmem:[%s2 + $0x6cc] sm:$0xf]
  %v485 = vld [vmem:[%s2 + $0x6d0] sm:$0xf]
  %v486 = vld [vmem:[%s2 + $0x6d4] sm:$0xf]
  %v487 = vld [vmem:[%s2 + $0x6d8] sm:$0xf]
  %v488 = vld [vmem:[%s2 + $0x6dc] sm:$0xf]
  %v489 = vld [vmem:[%s2 + $0x6e0] sm:$0xf]
  %v490 = vld [vmem:[%s2 + $0x6e4] sm:$0xf]
  %v491 = vld [vmem:[%s2 + $0x6e8] sm:$0xf]
  %v492 = vld [vmem:[%s2 + $0x6ec] sm:$0xf]
  %v493 = vld [vmem:[%s2 + $0x6f0] sm:$0xf]
  %v494 = vld [vmem:[%s2 + $0x6f4] sm:$0xf]
  %v495 = vld [vmem:[%s2 + $0x6f8] sm:$0xf]
  %v496 = vld [vmem:[%s2 + $0x6fc] sm:$0xf]
  %v497 = vld [vmem:[%s2 + $0x700] sm:$0xf]
  %v498 = vld [vmem:[%s2 + $0x704] sm:$0xf]
  %v499 = vld [vmem:[%s2 + $0x708] sm:$0xf]
  %v500 = vld [vmem:[%s2 + $0x70c] sm:$0xf]
  %v501 = vld [vmem:[%s2 + $0x710] sm:$0xf]
  %v502 = vld [vmem:[%s2 + $0x714] sm:$0xf]
  %v503 = vld [vmem:[%s2 + $0x718] sm:$0xf]
  %v504 = vld [vmem:[%s2 + $0x71c] sm:$0xf]
  %v505 = vld [vmem:[%s2 + $0x720] sm:$0xf]
  %v506 = vld [vmem:[%s2 + $0x724] sm:$0xf]
  %v507 = vld [vmem:[%s2 + $0x728] sm:$0xf]
  %v508 = vld [vmem:[%s2 + $0x72c] sm:$0xf]
  %v509 = vld [vmem:[%s2 + $0x730] sm:$0xf]
  %v510 = vld [vmem:[%s2 + $0x734] sm:$0xf]
  %v511 = vld [vmem:[%s2 + $0x738] sm:$0xf]
  %v512 = vld [vmem:[%s2 + $0x73c] sm:$0xf]
  %v513 = vld [vmem:[%s2 + $0x740] sm:$0xf]
  %v514 = vld [vmem:[%s2 + $0x744] sm:$0xf]
  %v515 = vld [vmem:[%s2 + $0x748] sm:$0xf]
  %v516 = vld [vmem:[%s2 + $0x74c] sm:$0xf]
  %v517 = vld [vmem:[%s2 + $0x750] sm:$0xf]
  %v518 = vld [vmem:[%s2 + $0x754] sm:$0xf]
  %v519 = vld [vmem:[%s2 + $0x758] sm:$0xf]
  %v520 = vld [vmem:[%s2 + $0x75c] sm:$0xf]
  %v521 = vld [vmem:[%s2 + $0x760] sm:$0xf]
  %v522 = vld [vmem:[%s2 + $0x764] sm:$0xf]
  %v523 = vld [vmem:[%s2 + $0x768] sm:$0xf]
  %v524 = vld [vmem:[%s2 + $0x76c] sm:$0xf]
  %v525 = vld [vmem:[%s2 + $0x770] sm:$0xf]
  %v526 = vld [vmem:[%s2 + $0x774] sm:$0xf]
  %v527 = vld [vmem:[%s2 + $0x778] sm:$0xf]
  %v528 = vld [vmem:[%s2 + $0x77c] sm:$0xf]
  %v529 = vld [vmem:[%s2 + $0x780] sm:$0xf]
  %v530 = vld [vmem:[%s2 + $0x784] sm:$0xf]
  %v531 = vld [vmem:[%s2 + $0x788] sm:$0xf]
  %v532 = vld [vmem:[%s2 + $0x78c] sm:$0xf]
  %v533 = vld [vmem:[%s2 + $0x790] sm:$0xf]
  %v534 = vld [vmem:[%s2 + $0x794] sm:$0xf]
  %v535 = vld [vmem:[%s2 + $0x798] sm:$0xf]
  %v536 = vld [vmem:[%s2 + $0x79c] sm:$0xf]
  %v537 = vld [vmem:[%s2 + $0x7a0] sm:$0xf]
  %v538 = vld [vmem:[%s2 + $0x7a4] sm:$0xf]
  %v539 = vld [vmem:[%s2 + $0x7a8] sm:$0xf]
  %v540 = vld [vmem:[%s2 + $0x7ac] sm:$0xf]
  %v541 = vld [vmem:[%s2 + $0x7b0] sm:$0xf]
  %v542 = vld [vmem:[%s2 + $0x7b4] sm:$0xf]
  %v543 = vld [vmem:[%s2 + $0x7b8] sm:$0xf]
  %v544 = vld [vmem:[%s2 + $0x7bc] sm:$0xf]
  %v545 = vld [vmem:[%s2 + $0x7c0] sm:$0xf]
  %v546 = vld [vmem:[%s2 + $0x7c4] sm:$0xf]
  %v547 = vld [vmem:[%s2 + $0x7c8] sm:$0xf]
  %v548 = vld [vmem:[%s2 + $0x7cc] sm:$0xf]
  %v549 = vld [vmem:[%s2 + $0x7d0] sm:$0xf]
  %v550 = vld [vmem:[%s2 + $0x7d4] sm:$0xf]
  %v551 = vld [vmem:[%s2 + $0x7d8] sm:$0xf]
  %v552 = vld [vmem:[%s2 + $0x7dc] sm:$0xf]
  %v553 = vld [vmem:[%s2 + $0x7e0] sm:$0xf]
  %v554 = vld [vmem:[%s2 + $0x7e4] sm:$0xf]
  %v555 = vld [vmem:[%s2 + $0x7e8] sm:$0xf]
  %v556 = vld [vmem:[%s2 + $0x7ec] sm:$0xf]
  %v557 = vld [vmem:[%s2 + $0x7f0] sm:$0xf]
  %v558 = vld [vmem:[%s2 + $0x7f4] sm:$0xf]
  %v559 = vld [vmem:[%s2 + $0x7f8] sm:$0xf]
  %v560 = vld [vmem:[%s2 + $0x7fc] sm:$0xf]
  %v561 = vld [vmem:[%s3] sm:$0x1]
  %v563 = vlaneseq
  %v564 = vshrl.u32 %v563, 7
  %v565 = vsub.s32 0, %v564
  %v566 = vrot.slane %v561, %v565
  %v584 = vunpack.c.l.b16 %v33
  %v585 = vunpack.c.h.b16 %v33
  %v586 = vunpack.c.l.b16 %v34
  %v587 = vunpack.c.h.b16 %v34
  %v588 = vunpack.c.l.b16 %v35
  %v589 = vunpack.c.h.b16 %v35
  %v590 = vunpack.c.l.b16 %v36
  %v591 = vunpack.c.h.b16 %v36
  %v592 = vunpack.c.l.b16 %v37
  %v593 = vunpack.c.h.b16 %v37
  %v594 = vunpack.c.l.b16 %v38
  %v595 = vunpack.c.h.b16 %v38
  %v596 = vunpack.c.l.b16 %v39
  %v597 = vunpack.c.h.b16 %v39
  %v598 = vunpack.c.l.b16 %v40
  %v599 = vunpack.c.h.b16 %v40
  %v600 = vunpack.c.l.b16 %v41
  %v601 = vunpack.c.h.b16 %v41
  %v602 = vunpack.c.l.b16 %v42
  %v603 = vunpack.c.h.b16 %v42
  %v604 = vunpack.c.l.b16 %v43
  %v605 = vunpack.c.h.b16 %v43
  %v606 = vunpack.c.l.b16 %v44
  %v607 = vunpack.c.h.b16 %v44
  %v608 = vunpack.c.l.b16 %v45
  %v609 = vunpack.c.h.b16 %v45
  %v610 = vunpack.c.l.b16 %v46
  %v611 = vunpack.c.h.b16 %v46
  %v612 = vunpack.c.l.b16 %v47
  %v613 = vunpack.c.h.b16 %v47
  %v614 = vunpack.c.l.b16 %v48
  %v615 = vunpack.c.h.b16 %v48
  %v616 = vpack.c.b16 %v584, %v584
  %v617 = vpack.c.b16 %v585, %v585
  %v618 = vpack.c.b16 %v586, %v586
  %v619 = vpack.c.b16 %v587, %v587
  %v620 = vpack.c.b16 %v588, %v588
  %v621 = vpack.c.b16 %v589, %v589
  %v622 = vpack.c.b16 %v590, %v590
  %v623 = vpack.c.b16 %v591, %v591
  %v624 = vpack.c.b16 %v592, %v592
  %v625 = vpack.c.b16 %v593, %v593
  %v626 = vpack.c.b16 %v594, %v594
  %v627 = vpack.c.b16 %v595, %v595
  %v628 = vpack.c.b16 %v596, %v596
  %v629 = vpack.c.b16 %v597, %v597
  %v630 = vpack.c.b16 %v598, %v598
  %v631 = vpack.c.b16 %v599, %v599
  %v632 = vpack.c.b16 %v600, %v600
  %v633 = vpack.c.b16 %v601, %v601
  %v634 = vpack.c.b16 %v602, %v602
  %v635 = vpack.c.b16 %v603, %v603
  %v636 = vpack.c.b16 %v604, %v604
  %v637 = vpack.c.b16 %v605, %v605
  %v638 = vpack.c.b16 %v606, %v606
  %v639 = vpack.c.b16 %v607, %v607
  %v640 = vpack.c.b16 %v608, %v608
  %v641 = vpack.c.b16 %v609, %v609
  %v642 = vpack.c.b16 %v610, %v610
  %v643 = vpack.c.b16 %v611, %v611
  %v644 = vpack.c.b16 %v612, %v612
  %v645 = vpack.c.b16 %v613, %v613
  %v646 = vpack.c.b16 %v614, %v614
  %v647 = vpack.c.b16 %v615, %v615
  %v1192 = vunpack.c.l.b16 %v49
  %v1193 = vunpack.c.l.b16 %v50
  %v1194 = vunpack.c.l.b16 %v51
  %v1195 = vunpack.c.l.b16 %v52
  %v1196 = vunpack.c.l.b16 %v53
  %v1197 = vunpack.c.l.b16 %v54
  %v1198 = vunpack.c.l.b16 %v55
  %v1199 = vunpack.c.l.b16 %v56
  %v1200 = vunpack.c.l.b16 %v57
  %v1201 = vunpack.c.l.b16 %v58
  %v1202 = vunpack.c.l.b16 %v59
  %v1203 = vunpack.c.l.b16 %v60
  %v1204 = vunpack.c.l.b16 %v61
  %v1205 = vunpack.c.l.b16 %v62
  %v1206 = vunpack.c.l.b16 %v63
  %v1207 = vunpack.c.l.b16 %v64
  %v1208 = vunpack.c.l.b16 %v65
  %v1209 = vunpack.c.l.b16 %v66
  %v1210 = vunpack.c.l.b16 %v67
  %v1211 = vunpack.c.l.b16 %v68
  %v1212 = vunpack.c.l.b16 %v69
  %v1213 = vunpack.c.l.b16 %v70
  %v1214 = vunpack.c.l.b16 %v71
  %v1215 = vunpack.c.l.b16 %v72
  %v1216 = vunpack.c.l.b16 %v73
  %v1217 = vunpack.c.l.b16 %v74
  %v1218 = vunpack.c.l.b16 %v75
  %v1219 = vunpack.c.l.b16 %v76
  %v1220 = vunpack.c.l.b16 %v77
  %v1221 = vunpack.c.l.b16 %v78
  %v1222 = vunpack.c.l.b16 %v79
  %v1223 = vunpack.c.l.b16 %v80
  %v1224 = vunpack.c.l.b16 %v81
  %v1225 = vunpack.c.l.b16 %v82
  %v1226 = vunpack.c.l.b16 %v83
  %v1227 = vunpack.c.l.b16 %v84
  %v1228 = vunpack.c.l.b16 %v85
  %v1229 = vunpack.c.l.b16 %v86
  %v1230 = vunpack.c.l.b16 %v87
  %v1231 = vunpack.c.l.b16 %v88
  %v1232 = vunpack.c.l.b16 %v89
  %v1233 = vunpack.c.l.b16 %v90
  %v1234 = vunpack.c.l.b16 %v91
  %v1235 = vunpack.c.l.b16 %v92
  %v1236 = vunpack.c.l.b16 %v93
  %v1237 = vunpack.c.l.b16 %v94
  %v1238 = vunpack.c.l.b16 %v95
  %v1239 = vunpack.c.l.b16 %v96
  %v1240 = vunpack.c.l.b16 %v97
  %v1241 = vunpack.c.l.b16 %v98
  %v1242 = vunpack.c.l.b16 %v99
  %v1243 = vunpack.c.l.b16 %v100
  %v1244 = vunpack.c.l.b16 %v101
  %v1245 = vunpack.c.l.b16 %v102
  %v1246 = vunpack.c.l.b16 %v103
  %v1247 = vunpack.c.l.b16 %v104
  %v1248 = vunpack.c.l.b16 %v105
  %v1249 = vunpack.c.l.b16 %v106
  %v1250 = vunpack.c.l.b16 %v107
  %v1251 = vunpack.c.l.b16 %v108
  %v1252 = vunpack.c.l.b16 %v109
  %v1253 = vunpack.c.l.b16 %v110
  %v1254 = vunpack.c.l.b16 %v111
  %v1255 = vunpack.c.l.b16 %v112
  %v1256 = vunpack.c.l.b16 %v113
  %v1257 = vunpack.c.l.b16 %v114
  %v1258 = vunpack.c.l.b16 %v115
  %v1259 = vunpack.c.l.b16 %v116
  %v1260 = vunpack.c.l.b16 %v117
  %v1261 = vunpack.c.l.b16 %v118
  %v1262 = vunpack.c.l.b16 %v119
  %v1263 = vunpack.c.l.b16 %v120
  %v1264 = vunpack.c.l.b16 %v121
  %v1265 = vunpack.c.l.b16 %v122
  %v1266 = vunpack.c.l.b16 %v123
  %v1267 = vunpack.c.l.b16 %v124
  %v1268 = vunpack.c.l.b16 %v125
  %v1269 = vunpack.c.l.b16 %v126
  %v1270 = vunpack.c.l.b16 %v127
  %v1271 = vunpack.c.l.b16 %v128
  %v1272 = vunpack.c.l.b16 %v129
  %v1273 = vunpack.c.l.b16 %v130
  %v1274 = vunpack.c.l.b16 %v131
  %v1275 = vunpack.c.l.b16 %v132
  %v1276 = vunpack.c.l.b16 %v133
  %v1277 = vunpack.c.l.b16 %v134
  %v1278 = vunpack.c.l.b16 %v135
  %v1279 = vunpack.c.l.b16 %v136
  %v1280 = vunpack.c.l.b16 %v137
  %v1281 = vunpack.c.l.b16 %v138
  %v1282 = vunpack.c.l.b16 %v139
  %v1283 = vunpack.c.l.b16 %v140
  %v1284 = vunpack.c.l.b16 %v141
  %v1285 = vunpack.c.l.b16 %v142
  %v1286 = vunpack.c.l.b16 %v143
  %v1287 = vunpack.c.l.b16 %v144
  %v1288 = vunpack.c.l.b16 %v145
  %v1289 = vunpack.c.l.b16 %v146
  %v1290 = vunpack.c.l.b16 %v147
  %v1291 = vunpack.c.l.b16 %v148
  %v1292 = vunpack.c.l.b16 %v149
  %v1293 = vunpack.c.l.b16 %v150
  %v1294 = vunpack.c.l.b16 %v151
  %v1295 = vunpack.c.l.b16 %v152
  %v1296 = vunpack.c.l.b16 %v153
  %v1297 = vunpack.c.l.b16 %v154
  %v1298 = vunpack.c.l.b16 %v155
  %v1299 = vunpack.c.l.b16 %v156
  %v1300 = vunpack.c.l.b16 %v157
  %v1301 = vunpack.c.l.b16 %v158
  %v1302 = vunpack.c.l.b16 %v159
  %v1303 = vunpack.c.l.b16 %v160
  %v1304 = vunpack.c.l.b16 %v161
  %v1305 = vunpack.c.l.b16 %v162
  %v1306 = vunpack.c.l.b16 %v163
  %v1307 = vunpack.c.l.b16 %v164
  %v1308 = vunpack.c.l.b16 %v165
  %v1309 = vunpack.c.l.b16 %v166
  %v1310 = vunpack.c.l.b16 %v167
  %v1311 = vunpack.c.l.b16 %v168
  %v1312 = vunpack.c.l.b16 %v169
  %v1313 = vunpack.c.l.b16 %v170
  %v1314 = vunpack.c.l.b16 %v171
  %v1315 = vunpack.c.l.b16 %v172
  %v1316 = vunpack.c.l.b16 %v173
  %v1317 = vunpack.c.l.b16 %v174
  %v1318 = vunpack.c.l.b16 %v175
  %v1319 = vunpack.c.l.b16 %v176
  %v1320 = vunpack.c.l.b16 %v177
  %v1321 = vunpack.c.l.b16 %v178
  %v1322 = vunpack.c.l.b16 %v179
  %v1323 = vunpack.c.l.b16 %v180
  %v1324 = vunpack.c.l.b16 %v181
  %v1325 = vunpack.c.l.b16 %v182
  %v1326 = vunpack.c.l.b16 %v183
  %v1327 = vunpack.c.l.b16 %v184
  %v1328 = vunpack.c.l.b16 %v185
  %v1329 = vunpack.c.l.b16 %v186
  %v1330 = vunpack.c.l.b16 %v187
  %v1331 = vunpack.c.l.b16 %v188
  %v1332 = vunpack.c.l.b16 %v189
  %v1333 = vunpack.c.l.b16 %v190
  %v1334 = vunpack.c.l.b16 %v191
  %v1335 = vunpack.c.l.b16 %v192
  %v1336 = vunpack.c.l.b16 %v193
  %v1337 = vunpack.c.l.b16 %v194
  %v1338 = vunpack.c.l.b16 %v195
  %v1339 = vunpack.c.l.b16 %v196
  %v1340 = vunpack.c.l.b16 %v197
  %v1341 = vunpack.c.l.b16 %v198
  %v1342 = vunpack.c.l.b16 %v199
  %v1343 = vunpack.c.l.b16 %v200
  %v1344 = vunpack.c.l.b16 %v201
  %v1345 = vunpack.c.l.b16 %v202
  %v1346 = vunpack.c.l.b16 %v203
  %v1347 = vunpack.c.l.b16 %v204
  %v1348 = vunpack.c.l.b16 %v205
  %v1349 = vunpack.c.l.b16 %v206
  %v1350 = vunpack.c.l.b16 %v207
  %v1351 = vunpack.c.l.b16 %v208
  %v1352 = vunpack.c.l.b16 %v209
  %v1353 = vunpack.c.l.b16 %v210
  %v1354 = vunpack.c.l.b16 %v211
  %v1355 = vunpack.c.l.b16 %v212
  %v1356 = vunpack.c.l.b16 %v213
  %v1357 = vunpack.c.l.b16 %v214
  %v1358 = vunpack.c.l.b16 %v215
  %v1359 = vunpack.c.l.b16 %v216
  %v1360 = vunpack.c.l.b16 %v217
  %v1361 = vunpack.c.l.b16 %v218
  %v1362 = vunpack.c.l.b16 %v219
  %v1363 = vunpack.c.l.b16 %v220
  %v1364 = vunpack.c.l.b16 %v221
  %v1365 = vunpack.c.l.b16 %v222
  %v1366 = vunpack.c.l.b16 %v223
  %v1367 = vunpack.c.l.b16 %v224
  %v1368 = vunpack.c.l.b16 %v225
  %v1369 = vunpack.c.l.b16 %v226
  %v1370 = vunpack.c.l.b16 %v227
  %v1371 = vunpack.c.l.b16 %v228
  %v1372 = vunpack.c.l.b16 %v229
  %v1373 = vunpack.c.l.b16 %v230
  %v1374 = vunpack.c.l.b16 %v231
  %v1375 = vunpack.c.l.b16 %v232
  %v1376 = vunpack.c.l.b16 %v233
  %v1377 = vunpack.c.l.b16 %v234
  %v1378 = vunpack.c.l.b16 %v235
  %v1379 = vunpack.c.l.b16 %v236
  %v1380 = vunpack.c.l.b16 %v237
  %v1381 = vunpack.c.l.b16 %v238
  %v1382 = vunpack.c.l.b16 %v239
  %v1383 = vunpack.c.l.b16 %v240
  %v1384 = vunpack.c.l.b16 %v241
  %v1385 = vunpack.c.l.b16 %v242
  %v1386 = vunpack.c.l.b16 %v243
  %v1387 = vunpack.c.l.b16 %v244
  %v1388 = vunpack.c.l.b16 %v245
  %v1389 = vunpack.c.l.b16 %v246
  %v1390 = vunpack.c.l.b16 %v247
  %v1391 = vunpack.c.l.b16 %v248
  %v1392 = vunpack.c.l.b16 %v249
  %v1393 = vunpack.c.l.b16 %v250
  %v1394 = vunpack.c.l.b16 %v251
  %v1395 = vunpack.c.l.b16 %v252
  %v1396 = vunpack.c.l.b16 %v253
  %v1397 = vunpack.c.l.b16 %v254
  %v1398 = vunpack.c.l.b16 %v255
  %v1399 = vunpack.c.l.b16 %v256
  %v1400 = vunpack.c.l.b16 %v257
  %v1401 = vunpack.c.l.b16 %v258
  %v1402 = vunpack.c.l.b16 %v259
  %v1403 = vunpack.c.l.b16 %v260
  %v1404 = vunpack.c.l.b16 %v261
  %v1405 = vunpack.c.l.b16 %v262
  %v1406 = vunpack.c.l.b16 %v263
  %v1407 = vunpack.c.l.b16 %v264
  %v1408 = vunpack.c.l.b16 %v265
  %v1409 = vunpack.c.l.b16 %v266
  %v1410 = vunpack.c.l.b16 %v267
  %v1411 = vunpack.c.l.b16 %v268
  %v1412 = vunpack.c.l.b16 %v269
  %v1413 = vunpack.c.l.b16 %v270
  %v1414 = vunpack.c.l.b16 %v271
  %v1415 = vunpack.c.l.b16 %v272
  %v1416 = vunpack.c.l.b16 %v273
  %v1417 = vunpack.c.l.b16 %v274
  %v1418 = vunpack.c.l.b16 %v275
  %v1419 = vunpack.c.l.b16 %v276
  %v1420 = vunpack.c.l.b16 %v277
  %v1421 = vunpack.c.l.b16 %v278
  %v1422 = vunpack.c.l.b16 %v279
  %v1423 = vunpack.c.l.b16 %v280
  %v1424 = vunpack.c.l.b16 %v281
  %v1425 = vunpack.c.l.b16 %v282
  %v1426 = vunpack.c.l.b16 %v283
  %v1427 = vunpack.c.l.b16 %v284
  %v1428 = vunpack.c.l.b16 %v285
  %v1429 = vunpack.c.l.b16 %v286
  %v1430 = vunpack.c.l.b16 %v287
  %v1431 = vunpack.c.l.b16 %v288
  %v1432 = vunpack.c.l.b16 %v289
  %v1433 = vunpack.c.l.b16 %v290
  %v1434 = vunpack.c.l.b16 %v291
  %v1435 = vunpack.c.l.b16 %v292
  %v1436 = vunpack.c.l.b16 %v293
  %v1437 = vunpack.c.l.b16 %v294
  %v1438 = vunpack.c.l.b16 %v295
  %v1439 = vunpack.c.l.b16 %v296
  %v1440 = vunpack.c.l.b16 %v297
  %v1441 = vunpack.c.l.b16 %v298
  %v1442 = vunpack.c.l.b16 %v299
  %v1443 = vunpack.c.l.b16 %v300
  %v1444 = vunpack.c.l.b16 %v301
  %v1445 = vunpack.c.l.b16 %v302
  %v1446 = vunpack.c.l.b16 %v303
  %v1447 = vunpack.c.l.b16 %v304
  %v1448 = vunpack.c.l.b16 %v305
  %v1449 = vunpack.c.l.b16 %v306
  %v1450 = vunpack.c.l.b16 %v307
  %v1451 = vunpack.c.l.b16 %v308
  %v1452 = vunpack.c.l.b16 %v309
  %v1453 = vunpack.c.l.b16 %v310
  %v1454 = vunpack.c.l.b16 %v311
  %v1455 = vunpack.c.l.b16 %v312
  %v1456 = vunpack.c.l.b16 %v313
  %v1457 = vunpack.c.l.b16 %v314
  %v1458 = vunpack.c.l.b16 %v315
  %v1459 = vunpack.c.l.b16 %v316
  %v1460 = vunpack.c.l.b16 %v317
  %v1461 = vunpack.c.l.b16 %v318
  %v1462 = vunpack.c.l.b16 %v319
  %v1463 = vunpack.c.l.b16 %v320
  %v1464 = vunpack.c.l.b16 %v321
  %v1465 = vunpack.c.l.b16 %v322
  %v1466 = vunpack.c.l.b16 %v323
  %v1467 = vunpack.c.l.b16 %v324
  %v1468 = vunpack.c.l.b16 %v325
  %v1469 = vunpack.c.l.b16 %v326
  %v1470 = vunpack.c.l.b16 %v327
  %v1471 = vunpack.c.l.b16 %v328
  %v1472 = vunpack.c.l.b16 %v329
  %v1473 = vunpack.c.l.b16 %v330
  %v1474 = vunpack.c.l.b16 %v331
  %v1475 = vunpack.c.l.b16 %v332
  %v1476 = vunpack.c.l.b16 %v333
  %v1477 = vunpack.c.l.b16 %v334
  %v1478 = vunpack.c.l.b16 %v335
  %v1479 = vunpack.c.l.b16 %v336
  %v1480 = vunpack.c.l.b16 %v337
  %v1481 = vunpack.c.l.b16 %v338
  %v1482 = vunpack.c.l.b16 %v339
  %v1483 = vunpack.c.l.b16 %v340
  %v1484 = vunpack.c.l.b16 %v341
  %v1485 = vunpack.c.l.b16 %v342
  %v1486 = vunpack.c.l.b16 %v343
  %v1487 = vunpack.c.l.b16 %v344
  %v1488 = vunpack.c.l.b16 %v345
  %v1489 = vunpack.c.l.b16 %v346
  %v1490 = vunpack.c.l.b16 %v347
  %v1491 = vunpack.c.l.b16 %v348
  %v1492 = vunpack.c.l.b16 %v349
  %v1493 = vunpack.c.l.b16 %v350
  %v1494 = vunpack.c.l.b16 %v351
  %v1495 = vunpack.c.l.b16 %v352
  %v1496 = vunpack.c.l.b16 %v353
  %v1497 = vunpack.c.l.b16 %v354
  %v1498 = vunpack.c.l.b16 %v355
  %v1499 = vunpack.c.l.b16 %v356
  %v1500 = vunpack.c.l.b16 %v357
  %v1501 = vunpack.c.l.b16 %v358
  %v1502 = vunpack.c.l.b16 %v359
  %v1503 = vunpack.c.l.b16 %v360
  %v1504 = vunpack.c.l.b16 %v361
  %v1505 = vunpack.c.l.b16 %v362
  %v1506 = vunpack.c.l.b16 %v363
  %v1507 = vunpack.c.l.b16 %v364
  %v1508 = vunpack.c.l.b16 %v365
  %v1509 = vunpack.c.l.b16 %v366
  %v1510 = vunpack.c.l.b16 %v367
  %v1511 = vunpack.c.l.b16 %v368
  %v1512 = vunpack.c.l.b16 %v369
  %v1513 = vunpack.c.l.b16 %v370
  %v1514 = vunpack.c.l.b16 %v371
  %v1515 = vunpack.c.l.b16 %v372
  %v1516 = vunpack.c.l.b16 %v373
  %v1517 = vunpack.c.l.b16 %v374
  %v1518 = vunpack.c.l.b16 %v375
  %v1519 = vunpack.c.l.b16 %v376
  %v1520 = vunpack.c.l.b16 %v377
  %v1521 = vunpack.c.l.b16 %v378
  %v1522 = vunpack.c.l.b16 %v379
  %v1523 = vunpack.c.l.b16 %v380
  %v1524 = vunpack.c.l.b16 %v381
  %v1525 = vunpack.c.l.b16 %v382
  %v1526 = vunpack.c.l.b16 %v383
  %v1527 = vunpack.c.l.b16 %v384
  %v1528 = vunpack.c.l.b16 %v385
  %v1529 = vunpack.c.l.b16 %v386
  %v1530 = vunpack.c.l.b16 %v387
  %v1531 = vunpack.c.l.b16 %v388
  %v1532 = vunpack.c.l.b16 %v389
  %v1533 = vunpack.c.l.b16 %v390
  %v1534 = vunpack.c.l.b16 %v391
  %v1535 = vunpack.c.l.b16 %v392
  %v1536 = vunpack.c.l.b16 %v393
  %v1537 = vunpack.c.l.b16 %v394
  %v1538 = vunpack.c.l.b16 %v395
  %v1539 = vunpack.c.l.b16 %v396
  %v1540 = vunpack.c.l.b16 %v397
  %v1541 = vunpack.c.l.b16 %v398
  %v1542 = vunpack.c.l.b16 %v399
  %v1543 = vunpack.c.l.b16 %v400
  %v1544 = vunpack.c.l.b16 %v401
  %v1545 = vunpack.c.l.b16 %v402
  %v1546 = vunpack.c.l.b16 %v403
  %v1547 = vunpack.c.l.b16 %v404
  %v1548 = vunpack.c.l.b16 %v405
  %v1549 = vunpack.c.l.b16 %v406
  %v1550 = vunpack.c.l.b16 %v407
  %v1551 = vunpack.c.l.b16 %v408
  %v1552 = vunpack.c.l.b16 %v409
  %v1553 = vunpack.c.l.b16 %v410
  %v1554 = vunpack.c.l.b16 %v411
  %v1555 = vunpack.c.l.b16 %v412
  %v1556 = vunpack.c.l.b16 %v413
  %v1557 = vunpack.c.l.b16 %v414
  %v1558 = vunpack.c.l.b16 %v415
  %v1559 = vunpack.c.l.b16 %v416
  %v1560 = vunpack.c.l.b16 %v417
  %v1561 = vunpack.c.l.b16 %v418
  %v1562 = vunpack.c.l.b16 %v419
  %v1563 = vunpack.c.l.b16 %v420
  %v1564 = vunpack.c.l.b16 %v421
  %v1565 = vunpack.c.l.b16 %v422
  %v1566 = vunpack.c.l.b16 %v423
  %v1567 = vunpack.c.l.b16 %v424
  %v1568 = vunpack.c.l.b16 %v425
  %v1569 = vunpack.c.l.b16 %v426
  %v1570 = vunpack.c.l.b16 %v427
  %v1571 = vunpack.c.l.b16 %v428
  %v1572 = vunpack.c.l.b16 %v429
  %v1573 = vunpack.c.l.b16 %v430
  %v1574 = vunpack.c.l.b16 %v431
  %v1575 = vunpack.c.l.b16 %v432
  %v1576 = vunpack.c.l.b16 %v433
  %v1577 = vunpack.c.l.b16 %v434
  %v1578 = vunpack.c.l.b16 %v435
  %v1579 = vunpack.c.l.b16 %v436
  %v1580 = vunpack.c.l.b16 %v437
  %v1581 = vunpack.c.l.b16 %v438
  %v1582 = vunpack.c.l.b16 %v439
  %v1583 = vunpack.c.l.b16 %v440
  %v1584 = vunpack.c.l.b16 %v441
  %v1585 = vunpack.c.l.b16 %v442
  %v1586 = vunpack.c.l.b16 %v443
  %v1587 = vunpack.c.l.b16 %v444
  %v1588 = vunpack.c.l.b16 %v445
  %v1589 = vunpack.c.l.b16 %v446
  %v1590 = vunpack.c.l.b16 %v447
  %v1591 = vunpack.c.l.b16 %v448
  %v1592 = vunpack.c.l.b16 %v449
  %v1593 = vunpack.c.l.b16 %v450
  %v1594 = vunpack.c.l.b16 %v451
  %v1595 = vunpack.c.l.b16 %v452
  %v1596 = vunpack.c.l.b16 %v453
  %v1597 = vunpack.c.l.b16 %v454
  %v1598 = vunpack.c.l.b16 %v455
  %v1599 = vunpack.c.l.b16 %v456
  %v1600 = vunpack.c.l.b16 %v457
  %v1601 = vunpack.c.l.b16 %v458
  %v1602 = vunpack.c.l.b16 %v459
  %v1603 = vunpack.c.l.b16 %v460
  %v1604 = vunpack.c.l.b16 %v461
  %v1605 = vunpack.c.l.b16 %v462
  %v1606 = vunpack.c.l.b16 %v463
  %v1607 = vunpack.c.l.b16 %v464
  %v1608 = vunpack.c.l.b16 %v465
  %v1609 = vunpack.c.l.b16 %v466
  %v1610 = vunpack.c.l.b16 %v467
  %v1611 = vunpack.c.l.b16 %v468
  %v1612 = vunpack.c.l.b16 %v469
  %v1613 = vunpack.c.l.b16 %v470
  %v1614 = vunpack.c.l.b16 %v471
  %v1615 = vunpack.c.l.b16 %v472
  %v1616 = vunpack.c.l.b16 %v473
  %v1617 = vunpack.c.l.b16 %v474
  %v1618 = vunpack.c.l.b16 %v475
  %v1619 = vunpack.c.l.b16 %v476
  %v1620 = vunpack.c.l.b16 %v477
  %v1621 = vunpack.c.l.b16 %v478
  %v1622 = vunpack.c.l.b16 %v479
  %v1623 = vunpack.c.l.b16 %v480
  %v1624 = vunpack.c.l.b16 %v481
  %v1625 = vunpack.c.l.b16 %v482
  %v1626 = vunpack.c.l.b16 %v483
  %v1627 = vunpack.c.l.b16 %v484
  %v1628 = vunpack.c.l.b16 %v485
  %v1629 = vunpack.c.l.b16 %v486
  %v1630 = vunpack.c.l.b16 %v487
  %v1631 = vunpack.c.l.b16 %v488
  %v1632 = vunpack.c.l.b16 %v489
  %v1633 = vunpack.c.l.b16 %v490
  %v1634 = vunpack.c.l.b16 %v491
  %v1635 = vunpack.c.l.b16 %v492
  %v1636 = vunpack.c.l.b16 %v493
  %v1637 = vunpack.c.l.b16 %v494
  %v1638 = vunpack.c.l.b16 %v495
  %v1639 = vunpack.c.l.b16 %v496
  %v1640 = vunpack.c.l.b16 %v497
  %v1641 = vunpack.c.l.b16 %v498
  %v1642 = vunpack.c.l.b16 %v499
  %v1643 = vunpack.c.l.b16 %v500
  %v1644 = vunpack.c.l.b16 %v501
  %v1645 = vunpack.c.l.b16 %v502
  %v1646 = vunpack.c.l.b16 %v503
  %v1647 = vunpack.c.l.b16 %v504
  %v1648 = vunpack.c.l.b16 %v505
  %v1649 = vunpack.c.l.b16 %v506
  %v1650 = vunpack.c.l.b16 %v507
  %v1651 = vunpack.c.l.b16 %v508
  %v1652 = vunpack.c.l.b16 %v509
  %v1653 = vunpack.c.l.b16 %v510
  %v1654 = vunpack.c.l.b16 %v511
  %v1655 = vunpack.c.l.b16 %v512
  %v1656 = vunpack.c.l.b16 %v513
  %v1657 = vunpack.c.l.b16 %v514
  %v1658 = vunpack.c.l.b16 %v515
  %v1659 = vunpack.c.l.b16 %v516
  %v1660 = vunpack.c.l.b16 %v517
  %v1661 = vunpack.c.l.b16 %v518
  %v1662 = vunpack.c.l.b16 %v519
  %v1663 = vunpack.c.l.b16 %v520
  %v1664 = vunpack.c.l.b16 %v521
  %v1665 = vunpack.c.l.b16 %v522
  %v1666 = vunpack.c.l.b16 %v523
  %v1667 = vunpack.c.l.b16 %v524
  %v1668 = vunpack.c.l.b16 %v525
  %v1669 = vunpack.c.l.b16 %v526
  %v1670 = vunpack.c.l.b16 %v527
  %v1671 = vunpack.c.l.b16 %v528
  %v1672 = vunpack.c.l.b16 %v529
  %v1673 = vunpack.c.l.b16 %v530
  %v1674 = vunpack.c.l.b16 %v531
  %v1675 = vunpack.c.l.b16 %v532
  %v1676 = vunpack.c.l.b16 %v533
  %v1677 = vunpack.c.l.b16 %v534
  %v1678 = vunpack.c.l.b16 %v535
  %v1679 = vunpack.c.l.b16 %v536
  %v1680 = vunpack.c.l.b16 %v537
  %v1681 = vunpack.c.l.b16 %v538
  %v1682 = vunpack.c.l.b16 %v539
  %v1683 = vunpack.c.l.b16 %v540
  %v1684 = vunpack.c.l.b16 %v541
  %v1685 = vunpack.c.l.b16 %v542
  %v1686 = vunpack.c.l.b16 %v543
  %v1687 = vunpack.c.l.b16 %v544
  %v1688 = vunpack.c.l.b16 %v545
  %v1689 = vunpack.c.l.b16 %v546
  %v1690 = vunpack.c.l.b16 %v547
  %v1691 = vunpack.c.l.b16 %v548
  %v1692 = vunpack.c.l.b16 %v549
  %v1693 = vunpack.c.l.b16 %v550
  %v1694 = vunpack.c.l.b16 %v551
  %v1695 = vunpack.c.l.b16 %v552
  %v1696 = vunpack.c.l.b16 %v553
  %v1697 = vunpack.c.l.b16 %v554
  %v1698 = vunpack.c.l.b16 %v555
  %v1699 = vunpack.c.l.b16 %v556
  %v1700 = vunpack.c.l.b16 %v557
  %v1701 = vunpack.c.l.b16 %v558
  %v1702 = vunpack.c.l.b16 %v559
  %v1703 = vunpack.c.l.b16 %v560
  %v1704 = vpack.c.b16 %v1193, %v1192
  %v1705 = vpack.c.b16 %v1195, %v1194
  %v1706 = vpack.c.b16 %v1197, %v1196
  %v1707 = vpack.c.b16 %v1199, %v1198
  %v1708 = vpack.c.b16 %v1201, %v1200
  %v1709 = vpack.c.b16 %v1203, %v1202
  %v1710 = vpack.c.b16 %v1205, %v1204
  %v1711 = vpack.c.b16 %v1207, %v1206
  %v1712 = vpack.c.b16 %v1209, %v1208
  %v1713 = vpack.c.b16 %v1211, %v1210
  %v1714 = vpack.c.b16 %v1213, %v1212
  %v1715 = vpack.c.b16 %v1215, %v1214
  %v1716 = vpack.c.b16 %v1217, %v1216
  %v1717 = vpack.c.b16 %v1219, %v1218
  %v1718 = vpack.c.b16 %v1221, %v1220
  %v1719 = vpack.c.b16 %v1223, %v1222
  %v1720 = vpack.c.b16 %v1225, %v1224
  %v1721 = vpack.c.b16 %v1227, %v1226
  %v1722 = vpack.c.b16 %v1229, %v1228
  %v1723 = vpack.c.b16 %v1231, %v1230
  %v1724 = vpack.c.b16 %v1233, %v1232
  %v1725 = vpack.c.b16 %v1235, %v1234
  %v1726 = vpack.c.b16 %v1237, %v1236
  %v1727 = vpack.c.b16 %v1239, %v1238
  %v1728 = vpack.c.b16 %v1241, %v1240
  %v1729 = vpack.c.b16 %v1243, %v1242
  %v1730 = vpack.c.b16 %v1245, %v1244
  %v1731 = vpack.c.b16 %v1247, %v1246
  %v1732 = vpack.c.b16 %v1249, %v1248
  %v1733 = vpack.c.b16 %v1251, %v1250
  %v1734 = vpack.c.b16 %v1253, %v1252
  %v1735 = vpack.c.b16 %v1255, %v1254
  %v1736 = vpack.c.b16 %v1257, %v1256
  %v1737 = vpack.c.b16 %v1259, %v1258
  %v1738 = vpack.c.b16 %v1261, %v1260
  %v1739 = vpack.c.b16 %v1263, %v1262
  %v1740 = vpack.c.b16 %v1265, %v1264
  %v1741 = vpack.c.b16 %v1267, %v1266
  %v1742 = vpack.c.b16 %v1269, %v1268
  %v1743 = vpack.c.b16 %v1271, %v1270
  %v1744 = vpack.c.b16 %v1273, %v1272
  %v1745 = vpack.c.b16 %v1275, %v1274
  %v1746 = vpack.c.b16 %v1277, %v1276
  %v1747 = vpack.c.b16 %v1279, %v1278
  %v1748 = vpack.c.b16 %v1281, %v1280
  %v1749 = vpack.c.b16 %v1283, %v1282
  %v1750 = vpack.c.b16 %v1285, %v1284
  %v1751 = vpack.c.b16 %v1287, %v1286
  %v1752 = vpack.c.b16 %v1289, %v1288
  %v1753 = vpack.c.b16 %v1291, %v1290
  %v1754 = vpack.c.b16 %v1293, %v1292
  %v1755 = vpack.c.b16 %v1295, %v1294
  %v1756 = vpack.c.b16 %v1297, %v1296
  %v1757 = vpack.c.b16 %v1299, %v1298
  %v1758 = vpack.c.b16 %v1301, %v1300
  %v1759 = vpack.c.b16 %v1303, %v1302
  %v1760 = vpack.c.b16 %v1305, %v1304
  %v1761 = vpack.c.b16 %v1307, %v1306
  %v1762 = vpack.c.b16 %v1309, %v1308
  %v1763 = vpack.c.b16 %v1311, %v1310
  %v1764 = vpack.c.b16 %v1313, %v1312
  %v1765 = vpack.c.b16 %v1315, %v1314
  %v1766 = vpack.c.b16 %v1317, %v1316
  %v1767 = vpack.c.b16 %v1319, %v1318
  %v1768 = vpack.c.b16 %v1321, %v1320
  %v1769 = vpack.c.b16 %v1323, %v1322
  %v1770 = vpack.c.b16 %v1325, %v1324
  %v1771 = vpack.c.b16 %v1327, %v1326
  %v1772 = vpack.c.b16 %v1329, %v1328
  %v1773 = vpack.c.b16 %v1331, %v1330
  %v1774 = vpack.c.b16 %v1333, %v1332
  %v1775 = vpack.c.b16 %v1335, %v1334
  %v1776 = vpack.c.b16 %v1337, %v1336
  %v1777 = vpack.c.b16 %v1339, %v1338
  %v1778 = vpack.c.b16 %v1341, %v1340
  %v1779 = vpack.c.b16 %v1343, %v1342
  %v1780 = vpack.c.b16 %v1345, %v1344
  %v1781 = vpack.c.b16 %v1347, %v1346
  %v1782 = vpack.c.b16 %v1349, %v1348
  %v1783 = vpack.c.b16 %v1351, %v1350
  %v1784 = vpack.c.b16 %v1353, %v1352
  %v1785 = vpack.c.b16 %v1355, %v1354
  %v1786 = vpack.c.b16 %v1357, %v1356
  %v1787 = vpack.c.b16 %v1359, %v1358
  %v1788 = vpack.c.b16 %v1361, %v1360
  %v1789 = vpack.c.b16 %v1363, %v1362
  %v1790 = vpack.c.b16 %v1365, %v1364
  %v1791 = vpack.c.b16 %v1367, %v1366
  %v1792 = vpack.c.b16 %v1369, %v1368
  %v1793 = vpack.c.b16 %v1371, %v1370
  %v1794 = vpack.c.b16 %v1373, %v1372
  %v1795 = vpack.c.b16 %v1375, %v1374
  %v1796 = vpack.c.b16 %v1377, %v1376
  %v1797 = vpack.c.b16 %v1379, %v1378
  %v1798 = vpack.c.b16 %v1381, %v1380
  %v1799 = vpack.c.b16 %v1383, %v1382
  %v1800 = vpack.c.b16 %v1385, %v1384
  %v1801 = vpack.c.b16 %v1387, %v1386
  %v1802 = vpack.c.b16 %v1389, %v1388
  %v1803 = vpack.c.b16 %v1391, %v1390
  %v1804 = vpack.c.b16 %v1393, %v1392
  %v1805 = vpack.c.b16 %v1395, %v1394
  %v1806 = vpack.c.b16 %v1397, %v1396
  %v1807 = vpack.c.b16 %v1399, %v1398
  %v1808 = vpack.c.b16 %v1401, %v1400
  %v1809 = vpack.c.b16 %v1403, %v1402
  %v1810 = vpack.c.b16 %v1405, %v1404
  %v1811 = vpack.c.b16 %v1407, %v1406
  %v1812 = vpack.c.b16 %v1409, %v1408
  %v1813 = vpack.c.b16 %v1411, %v1410
  %v1814 = vpack.c.b16 %v1413, %v1412
  %v1815 = vpack.c.b16 %v1415, %v1414
  %v1816 = vpack.c.b16 %v1417, %v1416
  %v1817 = vpack.c.b16 %v1419, %v1418
  %v1818 = vpack.c.b16 %v1421, %v1420
  %v1819 = vpack.c.b16 %v1423, %v1422
  %v1820 = vpack.c.b16 %v1425, %v1424
  %v1821 = vpack.c.b16 %v1427, %v1426
  %v1822 = vpack.c.b16 %v1429, %v1428
  %v1823 = vpack.c.b16 %v1431, %v1430
  %v1824 = vpack.c.b16 %v1433, %v1432
  %v1825 = vpack.c.b16 %v1435, %v1434
  %v1826 = vpack.c.b16 %v1437, %v1436
  %v1827 = vpack.c.b16 %v1439, %v1438
  %v1828 = vpack.c.b16 %v1441, %v1440
  %v1829 = vpack.c.b16 %v1443, %v1442
  %v1830 = vpack.c.b16 %v1445, %v1444
  %v1831 = vpack.c.b16 %v1447, %v1446
  %v1832 = vpack.c.b16 %v1449, %v1448
  %v1833 = vpack.c.b16 %v1451, %v1450
  %v1834 = vpack.c.b16 %v1453, %v1452
  %v1835 = vpack.c.b16 %v1455, %v1454
  %v1836 = vpack.c.b16 %v1457, %v1456
  %v1837 = vpack.c.b16 %v1459, %v1458
  %v1838 = vpack.c.b16 %v1461, %v1460
  %v1839 = vpack.c.b16 %v1463, %v1462
  %v1840 = vpack.c.b16 %v1465, %v1464
  %v1841 = vpack.c.b16 %v1467, %v1466
  %v1842 = vpack.c.b16 %v1469, %v1468
  %v1843 = vpack.c.b16 %v1471, %v1470
  %v1844 = vpack.c.b16 %v1473, %v1472
  %v1845 = vpack.c.b16 %v1475, %v1474
  %v1846 = vpack.c.b16 %v1477, %v1476
  %v1847 = vpack.c.b16 %v1479, %v1478
  %v1848 = vpack.c.b16 %v1481, %v1480
  %v1849 = vpack.c.b16 %v1483, %v1482
  %v1850 = vpack.c.b16 %v1485, %v1484
  %v1851 = vpack.c.b16 %v1487, %v1486
  %v1852 = vpack.c.b16 %v1489, %v1488
  %v1853 = vpack.c.b16 %v1491, %v1490
  %v1854 = vpack.c.b16 %v1493, %v1492
  %v1855 = vpack.c.b16 %v1495, %v1494
  %v1856 = vpack.c.b16 %v1497, %v1496
  %v1857 = vpack.c.b16 %v1499, %v1498
  %v1858 = vpack.c.b16 %v1501, %v1500
  %v1859 = vpack.c.b16 %v1503, %v1502
  %v1860 = vpack.c.b16 %v1505, %v1504
  %v1861 = vpack.c.b16 %v1507, %v1506
  %v1862 = vpack.c.b16 %v1509, %v1508
  %v1863 = vpack.c.b16 %v1511, %v1510
  %v1864 = vpack.c.b16 %v1513, %v1512
  %v1865 = vpack.c.b16 %v1515, %v1514
  %v1866 = vpack.c.b16 %v1517, %v1516
  %v1867 = vpack.c.b16 %v1519, %v1518
  %v1868 = vpack.c.b16 %v1521, %v1520
  %v1869 = vpack.c.b16 %v1523, %v1522
  %v1870 = vpack.c.b16 %v1525, %v1524
  %v1871 = vpack.c.b16 %v1527, %v1526
  %v1872 = vpack.c.b16 %v1529, %v1528
  %v1873 = vpack.c.b16 %v1531, %v1530
  %v1874 = vpack.c.b16 %v1533, %v1532
  %v1875 = vpack.c.b16 %v1535, %v1534
  %v1876 = vpack.c.b16 %v1537, %v1536
  %v1877 = vpack.c.b16 %v1539, %v1538
  %v1878 = vpack.c.b16 %v1541, %v1540
  %v1879 = vpack.c.b16 %v1543, %v1542
  %v1880 = vpack.c.b16 %v1545, %v1544
  %v1881 = vpack.c.b16 %v1547, %v1546
  %v1882 = vpack.c.b16 %v1549, %v1548
  %v1883 = vpack.c.b16 %v1551, %v1550
  %v1884 = vpack.c.b16 %v1553, %v1552
  %v1885 = vpack.c.b16 %v1555, %v1554
  %v1886 = vpack.c.b16 %v1557, %v1556
  %v1887 = vpack.c.b16 %v1559, %v1558
  %v1888 = vpack.c.b16 %v1561, %v1560
  %v1889 = vpack.c.b16 %v1563, %v1562
  %v1890 = vpack.c.b16 %v1565, %v1564
  %v1891 = vpack.c.b16 %v1567, %v1566
  %v1892 = vpack.c.b16 %v1569, %v1568
  %v1893 = vpack.c.b16 %v1571, %v1570
  %v1894 = vpack.c.b16 %v1573, %v1572
  %v1895 = vpack.c.b16 %v1575, %v1574
  %v1896 = vpack.c.b16 %v1577, %v1576
  %v1897 = vpack.c.b16 %v1579, %v1578
  %v1898 = vpack.c.b16 %v1581, %v1580
  %v1899 = vpack.c.b16 %v1583, %v1582
  %v1900 = vpack.c.b16 %v1585, %v1584
  %v1901 = vpack.c.b16 %v1587, %v1586
  %v1902 = vpack.c.b16 %v1589, %v1588
  %v1903 = vpack.c.b16 %v1591, %v1590
  %v1904 = vpack.c.b16 %v1593, %v1592
  %v1905 = vpack.c.b16 %v1595, %v1594
  %v1906 = vpack.c.b16 %v1597, %v1596
  %v1907 = vpack.c.b16 %v1599, %v1598
  %v1908 = vpack.c.b16 %v1601, %v1600
  %v1909 = vpack.c.b16 %v1603, %v1602
  %v1910 = vpack.c.b16 %v1605, %v1604
  %v1911 = vpack.c.b16 %v1607, %v1606
  %v1912 = vpack.c.b16 %v1609, %v1608
  %v1913 = vpack.c.b16 %v1611, %v1610
  %v1914 = vpack.c.b16 %v1613, %v1612
  %v1915 = vpack.c.b16 %v1615, %v1614
  %v1916 = vpack.c.b16 %v1617, %v1616
  %v1917 = vpack.c.b16 %v1619, %v1618
  %v1918 = vpack.c.b16 %v1621, %v1620
  %v1919 = vpack.c.b16 %v1623, %v1622
  %v1920 = vpack.c.b16 %v1625, %v1624
  %v1921 = vpack.c.b16 %v1627, %v1626
  %v1922 = vpack.c.b16 %v1629, %v1628
  %v1923 = vpack.c.b16 %v1631, %v1630
  %v1924 = vpack.c.b16 %v1633, %v1632
  %v1925 = vpack.c.b16 %v1635, %v1634
  %v1926 = vpack.c.b16 %v1637, %v1636
  %v1927 = vpack.c.b16 %v1639, %v1638
  %v1928 = vpack.c.b16 %v1641, %v1640
  %v1929 = vpack.c.b16 %v1643, %v1642
  %v1930 = vpack.c.b16 %v1645, %v1644
  %v1931 = vpack.c.b16 %v1647, %v1646
  %v1932 = vpack.c.b16 %v1649, %v1648
  %v1933 = vpack.c.b16 %v1651, %v1650
  %v1934 = vpack.c.b16 %v1653, %v1652
  %v1935 = vpack.c.b16 %v1655, %v1654
  %v1936 = vpack.c.b16 %v1657, %v1656
  %v1937 = vpack.c.b16 %v1659, %v1658
  %v1938 = vpack.c.b16 %v1661, %v1660
  %v1939 = vpack.c.b16 %v1663, %v1662
  %v1940 = vpack.c.b16 %v1665, %v1664
  %v1941 = vpack.c.b16 %v1667, %v1666
  %v1942 = vpack.c.b16 %v1669, %v1668
  %v1943 = vpack.c.b16 %v1671, %v1670
  %v1944 = vpack.c.b16 %v1673, %v1672
  %v1945 = vpack.c.b16 %v1675, %v1674
  %v1946 = vpack.c.b16 %v1677, %v1676
  %v1947 = vpack.c.b16 %v1679, %v1678
  %v1948 = vpack.c.b16 %v1681, %v1680
  %v1949 = vpack.c.b16 %v1683, %v1682
  %v1950 = vpack.c.b16 %v1685, %v1684
  %v1951 = vpack.c.b16 %v1687, %v1686
  %v1952 = vpack.c.b16 %v1689, %v1688
  %v1953 = vpack.c.b16 %v1691, %v1690
  %v1954 = vpack.c.b16 %v1693, %v1692
  %v1955 = vpack.c.b16 %v1695, %v1694
  %v1956 = vpack.c.b16 %v1697, %v1696
  %v1957 = vpack.c.b16 %v1699, %v1698
  %v1958 = vpack.c.b16 %v1701, %v1700
  %v1959 = vpack.c.b16 %v1703, %v1702
  %2216 = vmatprep.subr.bf16.mxu0 0
  %2217 = vmatpush1.bf16.msra.mxu0 %v1704
  %2218 = vmatprep.subr.bf16.mxu0 0
  %2219 = vmatpush1.bf16.msra.mxu0 %v1705
  %2220 = vmatprep.subr.bf16.mxu0 0
  %2221 = vmatpush1.bf16.msra.mxu0 %v1706
  %2222 = vmatprep.subr.bf16.mxu0 0
  %2223 = vmatpush1.bf16.msra.mxu0 %v1707
  %2224 = vmatprep.subr.bf16.mxu0 0
  %2225 = vmatpush1.bf16.msra.mxu0 %v1708
  %2226 = vmatprep.subr.bf16.mxu0 0
  %2227 = vmatpush1.bf16.msra.mxu0 %v1709
  %2228 = vmatprep.subr.bf16.mxu0 0
  %2229 = vmatpush1.bf16.msra.mxu0 %v1710
  %2230 = vmatprep.subr.bf16.mxu0 0
  %2231 = vmatpush1.bf16.msra.mxu0 %v1711
  %2232 = vmatprep.subr.bf16.mxu0 0
  %2233 = vmatpush1.bf16.msra.mxu0 %v1712
  %2234 = vmatprep.subr.bf16.mxu0 0
  %2235 = vmatpush1.bf16.msra.mxu0 %v1713
  %2236 = vmatprep.subr.bf16.mxu0 0
  %2237 = vmatpush1.bf16.msra.mxu0 %v1714
  %2238 = vmatprep.subr.bf16.mxu0 0
  %2239 = vmatpush1.bf16.msra.mxu0 %v1715
  %2240 = vmatprep.subr.bf16.mxu0 0
  %2241 = vmatpush1.bf16.msra.mxu0 %v1716
  %2242 = vmatprep.subr.bf16.mxu0 0
  %2243 = vmatpush1.bf16.msra.mxu0 %v1717
  %2244 = vmatprep.subr.bf16.mxu0 0
  %2245 = vmatpush1.bf16.msra.mxu0 %v1718
  %2246 = vmatprep.subr.bf16.mxu0 0
  %2247 = vmatpush1.bf16.msra.mxu0 %v1719
  %2248 = vmatprep.mubr.bf16.mxu0 %v617
  %2249 = vmatmul.mubr.bf16.gmra.mrb[0].mxu0 %v616
  %v2250 = vpop.f32.mrb[0].mxu0
  %v2251 = vadd.f32 %v566, %v2250
  %v2252 = vpop.f32.mrb[0].mxu0
  %v2253 = vpop.f32.mrb[0].mxu0
  %v2254 = vpop.f32.mrb[0].mxu0
  %2255 = vdwg.mxu0
  %2256 = vmatprep.subr.bf16.mxu0 0
  %2257 = vmatpush1.bf16.msra.mxu0 %v1720
  %2258 = vmatprep.subr.bf16.mxu0 0
  %2259 = vmatpush1.bf16.msra.mxu0 %v1721
  %2260 = vmatprep.subr.bf16.mxu0 0
  %2261 = vmatpush1.bf16.msra.mxu0 %v1722
  %2262 = vmatprep.subr.bf16.mxu0 0
  %2263 = vmatpush1.bf16.msra.mxu0 %v1723
  %2264 = vmatprep.subr.bf16.mxu0 0
  %2265 = vmatpush1.bf16.msra.mxu0 %v1724
  %2266 = vmatprep.subr.bf16.mxu0 0
  %2267 = vmatpush1.bf16.msra.mxu0 %v1725
  %2268 = vmatprep.subr.bf16.mxu0 0
  %2269 = vmatpush1.bf16.msra.mxu0 %v1726
  %2270 = vmatprep.subr.bf16.mxu0 0
  %2271 = vmatpush1.bf16.msra.mxu0 %v1727
  %2272 = vmatprep.subr.bf16.mxu0 0
  %2273 = vmatpush1.bf16.msra.mxu0 %v1728
  %2274 = vmatprep.subr.bf16.mxu0 0
  %2275 = vmatpush1.bf16.msra.mxu0 %v1729
  %2276 = vmatprep.subr.bf16.mxu0 0
  %2277 = vmatpush1.bf16.msra.mxu0 %v1730
  %2278 = vmatprep.subr.bf16.mxu0 0
  %2279 = vmatpush1.bf16.msra.mxu0 %v1731
  %2280 = vmatprep.subr.bf16.mxu0 0
  %2281 = vmatpush1.bf16.msra.mxu0 %v1732
  %2282 = vmatprep.subr.bf16.mxu0 0
  %2283 = vmatpush1.bf16.msra.mxu0 %v1733
  %2284 = vmatprep.subr.bf16.mxu0 0
  %2285 = vmatpush1.bf16.msra.mxu0 %v1734
  %2286 = vmatprep.subr.bf16.mxu0 0
  %2287 = vmatpush1.bf16.msra.mxu0 %v1735
  %2288 = vmatprep.mubr.bf16.mxu0 %v619
  %2289 = vmatmul.mubr.bf16.gmra.mrb[0].mxu0 %v618
  %v2290 = vpop.f32.mrb[0].mxu0
  %v2291 = vadd.f32 %v2251, %v2290
  %v2292 = vpop.f32.mrb[0].mxu0
  %v2293 = vpop.f32.mrb[0].mxu0
  %v2294 = vpop.f32.mrb[0].mxu0
  %2295 = vdwg.mxu0
  %2296 = vmatprep.subr.bf16.mxu0 0
  %2297 = vmatpush1.bf16.msra.mxu0 %v1736
  %2298 = vmatprep.subr.bf16.mxu0 0
  %2299 = vmatpush1.bf16.msra.mxu0 %v1737
  %2300 = vmatprep.subr.bf16.mxu0 0
  %2301 = vmatpush1.bf16.msra.mxu0 %v1738
  %2302 = vmatprep.subr.bf16.mxu0 0
  %2303 = vmatpush1.bf16.msra.mxu0 %v1739
  %2304 = vmatprep.subr.bf16.mxu0 0
  %2305 = vmatpush1.bf16.msra.mxu0 %v1740
  %2306 = vmatprep.subr.bf16.mxu0 0
  %2307 = vmatpush1.bf16.msra.mxu0 %v1741
  %2308 = vmatprep.subr.bf16.mxu0 0
  %2309 = vmatpush1.bf16.msra.mxu0 %v1742
  %2310 = vmatprep.subr.bf16.mxu0 0
  %2311 = vmatpush1.bf16.msra.mxu0 %v1743
  %2312 = vmatprep.subr.bf16.mxu0 0
  %2313 = vmatpush1.bf16.msra.mxu0 %v1744
  %2314 = vmatprep.subr.bf16.mxu0 0
  %2315 = vmatpush1.bf16.msra.mxu0 %v1745
  %2316 = vmatprep.subr.bf16.mxu0 0
  %2317 = vmatpush1.bf16.msra.mxu0 %v1746
  %2318 = vmatprep.subr.bf16.mxu0 0
  %2319 = vmatpush1.bf16.msra.mxu0 %v1747
  %2320 = vmatprep.subr.bf16.mxu0 0
  %2321 = vmatpush1.bf16.msra.mxu0 %v1748
  %2322 = vmatprep.subr.bf16.mxu0 0
  %2323 = vmatpush1.bf16.msra.mxu0 %v1749
  %2324 = vmatprep.subr.bf16.mxu0 0
  %2325 = vmatpush1.bf16.msra.mxu0 %v1750
  %2326 = vmatprep.subr.bf16.mxu0 0
  %2327 = vmatpush1.bf16.msra.mxu0 %v1751
  %2328 = vmatprep.mubr.bf16.mxu0 %v621
  %2329 = vmatmul.mubr.bf16.gmra.mrb[0].mxu0 %v620
  %v2330 = vpop.f32.mrb[0].mxu0
  %v2331 = vadd.f32 %v2291, %v2330
  %v2332 = vpop.f32.mrb[0].mxu0
  %v2333 = vpop.f32.mrb[0].mxu0
  %v2334 = vpop.f32.mrb[0].mxu0
  %2335 = vdwg.mxu0
  %2336 = vmatprep.subr.bf16.mxu0 0
  %2337 = vmatpush1.bf16.msra.mxu0 %v1752
  %2338 = vmatprep.subr.bf16.mxu0 0
  %2339 = vmatpush1.bf16.msra.mxu0 %v1753
  %2340 = vmatprep.subr.bf16.mxu0 0
  %2341 = vmatpush1.bf16.msra.mxu0 %v1754
  %2342 = vmatprep.subr.bf16.mxu0 0
  %2343 = vmatpush1.bf16.msra.mxu0 %v1755
  %2344 = vmatprep.subr.bf16.mxu0 0
  %2345 = vmatpush1.bf16.msra.mxu0 %v1756
  %2346 = vmatprep.subr.bf16.mxu0 0
  %2347 = vmatpush1.bf16.msra.mxu0 %v1757
  %2348 = vmatprep.subr.bf16.mxu0 0
  %2349 = vmatpush1.bf16.msra.mxu0 %v1758
  %2350 = vmatprep.subr.bf16.mxu0 0
  %2351 = vmatpush1.bf16.msra.mxu0 %v1759
  %2352 = vmatprep.subr.bf16.mxu0 0
  %2353 = vmatpush1.bf16.msra.mxu0 %v1760
  %2354 = vmatprep.subr.bf16.mxu0 0
  %2355 = vmatpush1.bf16.msra.mxu0 %v1761
  %2356 = vmatprep.subr.bf16.mxu0 0
  %2357 = vmatpush1.bf16.msra.mxu0 %v1762
  %2358 = vmatprep.subr.bf16.mxu0 0
  %2359 = vmatpush1.bf16.msra.mxu0 %v1763
  %2360 = vmatprep.subr.bf16.mxu0 0
  %2361 = vmatpush1.bf16.msra.mxu0 %v1764
  %2362 = vmatprep.subr.bf16.mxu0 0
  %2363 = vmatpush1.bf16.msra.mxu0 %v1765
  %2364 = vmatprep.subr.bf16.mxu0 0
  %2365 = vmatpush1.bf16.msra.mxu0 %v1766
  %2366 = vmatprep.subr.bf16.mxu0 0
  %2367 = vmatpush1.bf16.msra.mxu0 %v1767
  %2368 = vmatprep.mubr.bf16.mxu0 %v623
  %2369 = vmatmul.mubr.bf16.gmra.mrb[0].mxu0 %v622
  %v2370 = vpop.f32.mrb[0].mxu0
  %v2371 = vadd.f32 %v2331, %v2370
  %v2372 = vpop.f32.mrb[0].mxu0
  %v2373 = vpop.f32.mrb[0].mxu0
  %v2374 = vpop.f32.mrb[0].mxu0
  %2375 = vdwg.mxu0
  %2376 = vmatprep.subr.bf16.mxu0 0
  %2377 = vmatpush1.bf16.msra.mxu0 %v1768
  %2378 = vmatprep.subr.bf16.mxu0 0
  %2379 = vmatpush1.bf16.msra.mxu0 %v1769
  %2380 = vmatprep.subr.bf16.mxu0 0
  %2381 = vmatpush1.bf16.msra.mxu0 %v1770
  %2382 = vmatprep.subr.bf16.mxu0 0
  %2383 = vmatpush1.bf16.msra.mxu0 %v1771
  %2384 = vmatprep.subr.bf16.mxu0 0
  %2385 = vmatpush1.bf16.msra.mxu0 %v1772
  %2386 = vmatprep.subr.bf16.mxu0 0
  %2387 = vmatpush1.bf16.msra.mxu0 %v1773
  %2388 = vmatprep.subr.bf16.mxu0 0
  %2389 = vmatpush1.bf16.msra.mxu0 %v1774
  %2390 = vmatprep.subr.bf16.mxu0 0
  %2391 = vmatpush1.bf16.msra.mxu0 %v1775
  %2392 = vmatprep.subr.bf16.mxu0 0
  %2393 = vmatpush1.bf16.msra.mxu0 %v1776
  %2394 = vmatprep.subr.bf16.mxu0 0
  %2395 = vmatpush1.bf16.msra.mxu0 %v1777
  %2396 = vmatprep.subr.bf16.mxu0 0
  %2397 = vmatpush1.bf16.msra.mxu0 %v1778
  %2398 = vmatprep.subr.bf16.mxu0 0
  %2399 = vmatpush1.bf16.msra.mxu0 %v1779
  %2400 = vmatprep.subr.bf16.mxu0 0
  %2401 = vmatpush1.bf16.msra.mxu0 %v1780
  %2402 = vmatprep.subr.bf16.mxu0 0
  %2403 = vmatpush1.bf16.msra.mxu0 %v1781
  %2404 = vmatprep.subr.bf16.mxu0 0
  %2405 = vmatpush1.bf16.msra.mxu0 %v1782
  %2406 = vmatprep.subr.bf16.mxu0 0
  %2407 = vmatpush1.bf16.msra.mxu0 %v1783
  %2408 = vmatprep.mubr.bf16.mxu0 %v625
  %2409 = vmatmul.mubr.bf16.gmra.mrb[0].mxu0 %v624
  %v2410 = vpop.f32.mrb[0].mxu0
  %v2411 = vadd.f32 %v2371, %v2410
  %v2412 = vpop.f32.mrb[0].mxu0
  %v2413 = vpop.f32.mrb[0].mxu0
  %v2414 = vpop.f32.mrb[0].mxu0
  %2415 = vdwg.mxu0
  %2416 = vmatprep.subr.bf16.mxu0 0
  %2417 = vmatpush1.bf16.msra.mxu0 %v1784
  %2418 = vmatprep.subr.bf16.mxu0 0
  %2419 = vmatpush1.bf16.msra.mxu0 %v1785
  %2420 = vmatprep.subr.bf16.mxu0 0
  %2421 = vmatpush1.bf16.msra.mxu0 %v1786
  %2422 = vmatprep.subr.bf16.mxu0 0
  %2423 = vmatpush1.bf16.msra.mxu0 %v1787
  %2424 = vmatprep.subr.bf16.mxu0 0
  %2425 = vmatpush1.bf16.msra.mxu0 %v1788
  %2426 = vmatprep.subr.bf16.mxu0 0
  %2427 = vmatpush1.bf16.msra.mxu0 %v1789
  %2428 = vmatprep.subr.bf16.mxu0 0
  %2429 = vmatpush1.bf16.msra.mxu0 %v1790
  %2430 = vmatprep.subr.bf16.mxu0 0
  %2431 = vmatpush1.bf16.msra.mxu0 %v1791
  %2432 = vmatprep.subr.bf16.mxu0 0
  %2433 = vmatpush1.bf16.msra.mxu0 %v1792
  %2434 = vmatprep.subr.bf16.mxu0 0
  %2435 = vmatpush1.bf16.msra.mxu0 %v1793
  %2436 = vmatprep.subr.bf16.mxu0 0
  %2437 = vmatpush1.bf16.msra.mxu0 %v1794
  %2438 = vmatprep.subr.bf16.mxu0 0
  %2439 = vmatpush1.bf16.msra.mxu0 %v1795
  %2440 = vmatprep.subr.bf16.mxu0 0
  %2441 = vmatpush1.bf16.msra.mxu0 %v1796
  %2442 = vmatprep.subr.bf16.mxu0 0
  %2443 = vmatpush1.bf16.msra.mxu0 %v1797
  %2444 = vmatprep.subr.bf16.mxu0 0
  %2445 = vmatpush1.bf16.msra.mxu0 %v1798
  %2446 = vmatprep.subr.bf16.mxu0 0
  %2447 = vmatpush1.bf16.msra.mxu0 %v1799
  %2448 = vmatprep.mubr.bf16.mxu0 %v627
  %2449 = vmatmul.mubr.bf16.gmra.mrb[0].mxu0 %v626
  %v2450 = vpop.f32.mrb[0].mxu0
  %v2451 = vadd.f32 %v2411, %v2450
  %v2452 = vpop.f32.mrb[0].mxu0
  %v2453 = vpop.f32.mrb[0].mxu0
  %v2454 = vpop.f32.mrb[0].mxu0
  %2455 = vdwg.mxu0
  %2456 = vmatprep.subr.bf16.mxu0 0
  %2457 = vmatpush1.bf16.msra.mxu0 %v1800
  %2458 = vmatprep.subr.bf16.mxu0 0
  %2459 = vmatpush1.bf16.msra.mxu0 %v1801
  %2460 = vmatprep.subr.bf16.mxu0 0
  %2461 = vmatpush1.bf16.msra.mxu0 %v1802
  %2462 = vmatprep.subr.bf16.mxu0 0
  %2463 = vmatpush1.bf16.msra.mxu0 %v1803
  %2464 = vmatprep.subr.bf16.mxu0 0
  %2465 = vmatpush1.bf16.msra.mxu0 %v1804
  %2466 = vmatprep.subr.bf16.mxu0 0
  %2467 = vmatpush1.bf16.msra.mxu0 %v1805
  %2468 = vmatprep.subr.bf16.mxu0 0
  %2469 = vmatpush1.bf16.msra.mxu0 %v1806
  %2470 = vmatprep.subr.bf16.mxu0 0
  %2471 = vmatpush1.bf16.msra.mxu0 %v1807
  %2472 = vmatprep.subr.bf16.mxu0 0
  %2473 = vmatpush1.bf16.msra.mxu0 %v1808
  %2474 = vmatprep.subr.bf16.mxu0 0
  %2475 = vmatpush1.bf16.msra.mxu0 %v1809
  %2476 = vmatprep.subr.bf16.mxu0 0
  %2477 = vmatpush1.bf16.msra.mxu0 %v1810
  %2478 = vmatprep.subr.bf16.mxu0 0
  %2479 = vmatpush1.bf16.msra.mxu0 %v1811
  %2480 = vmatprep.subr.bf16.mxu0 0
  %2481 = vmatpush1.bf16.msra.mxu0 %v1812
  %2482 = vmatprep.subr.bf16.mxu0 0
  %2483 = vmatpush1.bf16.msra.mxu0 %v1813
  %2484 = vmatprep.subr.bf16.mxu0 0
  %2485 = vmatpush1.bf16.msra.mxu0 %v1814
  %2486 = vmatprep.subr.bf16.mxu0 0
  %2487 = vmatpush1.bf16.msra.mxu0 %v1815
  %2488 = vmatprep.mubr.bf16.mxu0 %v629
  %2489 = vmatmul.mubr.bf16.gmra.mrb[0].mxu0 %v628
  %v2490 = vpop.f32.mrb[0].mxu0
  %v2491 = vadd.f32 %v2451, %v2490
  %v2492 = vpop.f32.mrb[0].mxu0
  %v2493 = vpop.f32.mrb[0].mxu0
  %v2494 = vpop.f32.mrb[0].mxu0
  %2495 = vdwg.mxu0
  %2496 = vmatprep.subr.bf16.mxu0 0
  %2497 = vmatpush1.bf16.msra.mxu0 %v1816
  %2498 = vmatprep.subr.bf16.mxu0 0
  %2499 = vmatpush1.bf16.msra.mxu0 %v1817
  %2500 = vmatprep.subr.bf16.mxu0 0
  %2501 = vmatpush1.bf16.msra.mxu0 %v1818
  %2502 = vmatprep.subr.bf16.mxu0 0
  %2503 = vmatpush1.bf16.msra.mxu0 %v1819
  %2504 = vmatprep.subr.bf16.mxu0 0
  %2505 = vmatpush1.bf16.msra.mxu0 %v1820
  %2506 = vmatprep.subr.bf16.mxu0 0
  %2507 = vmatpush1.bf16.msra.mxu0 %v1821
  %2508 = vmatprep.subr.bf16.mxu0 0
  %2509 = vmatpush1.bf16.msra.mxu0 %v1822
  %2510 = vmatprep.subr.bf16.mxu0 0
  %2511 = vmatpush1.bf16.msra.mxu0 %v1823
  %2512 = vmatprep.subr.bf16.mxu0 0
  %2513 = vmatpush1.bf16.msra.mxu0 %v1824
  %2514 = vmatprep.subr.bf16.mxu0 0
  %2515 = vmatpush1.bf16.msra.mxu0 %v1825
  %2516 = vmatprep.subr.bf16.mxu0 0
  %2517 = vmatpush1.bf16.msra.mxu0 %v1826
  %2518 = vmatprep.subr.bf16.mxu0 0
  %2519 = vmatpush1.bf16.msra.mxu0 %v1827
  %2520 = vmatprep.subr.bf16.mxu0 0
  %2521 = vmatpush1.bf16.msra.mxu0 %v1828
  %2522 = vmatprep.subr.bf16.mxu0 0
  %2523 = vmatpush1.bf16.msra.mxu0 %v1829
  %2524 = vmatprep.subr.bf16.mxu0 0
  %2525 = vmatpush1.bf16.msra.mxu0 %v1830
  %2526 = vmatprep.subr.bf16.mxu0 0
  %2527 = vmatpush1.bf16.msra.mxu0 %v1831
  %2528 = vmatprep.mubr.bf16.mxu0 %v631
  %2529 = vmatmul.mubr.bf16.gmra.mrb[0].mxu0 %v630
  %v2530 = vpop.f32.mrb[0].mxu0
  %v2531 = vadd.f32 %v2491, %v2530
  %v2532 = vpop.f32.mrb[0].mxu0
  %v2533 = vpop.f32.mrb[0].mxu0
  %v2534 = vpop.f32.mrb[0].mxu0
  %2535 = vdwg.mxu0
  %2536 = vmatprep.subr.bf16.mxu0 0
  %2537 = vmatpush1.bf16.msra.mxu0 %v1832
  %2538 = vmatprep.subr.bf16.mxu0 0
  %2539 = vmatpush1.bf16.msra.mxu0 %v1833
  %2540 = vmatprep.subr.bf16.mxu0 0
  %2541 = vmatpush1.bf16.msra.mxu0 %v1834
  %2542 = vmatprep.subr.bf16.mxu0 0
  %2543 = vmatpush1.bf16.msra.mxu0 %v1835
  %2544 = vmatprep.subr.bf16.mxu0 0
  %2545 = vmatpush1.bf16.msra.mxu0 %v1836
  %2546 = vmatprep.subr.bf16.mxu0 0
  %2547 = vmatpush1.bf16.msra.mxu0 %v1837
  %2548 = vmatprep.subr.bf16.mxu0 0
  %2549 = vmatpush1.bf16.msra.mxu0 %v1838
  %2550 = vmatprep.subr.bf16.mxu0 0
  %2551 = vmatpush1.bf16.msra.mxu0 %v1839
  %2552 = vmatprep.subr.bf16.mxu0 0
  %2553 = vmatpush1.bf16.msra.mxu0 %v1840
  %2554 = vmatprep.subr.bf16.mxu0 0
  %2555 = vmatpush1.bf16.msra.mxu0 %v1841
  %2556 = vmatprep.subr.bf16.mxu0 0
  %2557 = vmatpush1.bf16.msra.mxu0 %v1842
  %2558 = vmatprep.subr.bf16.mxu0 0
  %2559 = vmatpush1.bf16.msra.mxu0 %v1843
  %2560 = vmatprep.subr.bf16.mxu0 0
  %2561 = vmatpush1.bf16.msra.mxu0 %v1844
  %2562 = vmatprep.subr.bf16.mxu0 0
  %2563 = vmatpush1.bf16.msra.mxu0 %v1845
  %2564 = vmatprep.subr.bf16.mxu0 0
  %2565 = vmatpush1.bf16.msra.mxu0 %v1846
  %2566 = vmatprep.subr.bf16.mxu0 0
  %2567 = vmatpush1.bf16.msra.mxu0 %v1847
  %2568 = vmatprep.mubr.bf16.mxu0 %v633
  %2569 = vmatmul.mubr.bf16.gmra.mrb[0].mxu0 %v632
  %v2570 = vpop.f32.mrb[0].mxu0
  %v2571 = vadd.f32 %v2531, %v2570
  %v2572 = vpop.f32.mrb[0].mxu0
  %v2573 = vpop.f32.mrb[0].mxu0
  %v2574 = vpop.f32.mrb[0].mxu0
  %2575 = vdwg.mxu0
  %2576 = vmatprep.subr.bf16.mxu0 0
  %2577 = vmatpush1.bf16.msra.mxu0 %v1848
  %2578 = vmatprep.subr.bf16.mxu0 0
  %2579 = vmatpush1.bf16.msra.mxu0 %v1849
  %2580 = vmatprep.subr.bf16.mxu0 0
  %2581 = vmatpush1.bf16.msra.mxu0 %v1850
  %2582 = vmatprep.subr.bf16.mxu0 0
  %2583 = vmatpush1.bf16.msra.mxu0 %v1851
  %2584 = vmatprep.subr.bf16.mxu0 0
  %2585 = vmatpush1.bf16.msra.mxu0 %v1852
  %2586 = vmatprep.subr.bf16.mxu0 0
  %2587 = vmatpush1.bf16.msra.mxu0 %v1853
  %2588 = vmatprep.subr.bf16.mxu0 0
  %2589 = vmatpush1.bf16.msra.mxu0 %v1854
  %2590 = vmatprep.subr.bf16.mxu0 0
  %2591 = vmatpush1.bf16.msra.mxu0 %v1855
  %2592 = vmatprep.subr.bf16.mxu0 0
  %2593 = vmatpush1.bf16.msra.mxu0 %v1856
  %2594 = vmatprep.subr.bf16.mxu0 0
  %2595 = vmatpush1.bf16.msra.mxu0 %v1857
  %2596 = vmatprep.subr.bf16.mxu0 0
  %2597 = vmatpush1.bf16.msra.mxu0 %v1858
  %2598 = vmatprep.subr.bf16.mxu0 0
  %2599 = vmatpush1.bf16.msra.mxu0 %v1859
  %2600 = vmatprep.subr.bf16.mxu0 0
  %2601 = vmatpush1.bf16.msra.mxu0 %v1860
  %2602 = vmatprep.subr.bf16.mxu0 0
  %2603 = vmatpush1.bf16.msra.mxu0 %v1861
  %2604 = vmatprep.subr.bf16.mxu0 0
  %2605 = vmatpush1.bf16.msra.mxu0 %v1862
  %2606 = vmatprep.subr.bf16.mxu0 0
  %2607 = vmatpush1.bf16.msra.mxu0 %v1863
  %2608 = vmatprep.mubr.bf16.mxu0 %v635
  %2609 = vmatmul.mubr.bf16.gmra.mrb[0].mxu0 %v634
  %v2610 = vpop.f32.mrb[0].mxu0
  %v2611 = vadd.f32 %v2571, %v2610
  %v2612 = vpop.f32.mrb[0].mxu0
  %v2613 = vpop.f32.mrb[0].mxu0
  %v2614 = vpop.f32.mrb[0].mxu0
  %2615 = vdwg.mxu0
  %2616 = vmatprep.subr.bf16.mxu0 0
  %2617 = vmatpush1.bf16.msra.mxu0 %v1864
  %2618 = vmatprep.subr.bf16.mxu0 0
  %2619 = vmatpush1.bf16.msra.mxu0 %v1865
  %2620 = vmatprep.subr.bf16.mxu0 0
  %2621 = vmatpush1.bf16.msra.mxu0 %v1866
  %2622 = vmatprep.subr.bf16.mxu0 0
  %2623 = vmatpush1.bf16.msra.mxu0 %v1867
  %2624 = vmatprep.subr.bf16.mxu0 0
  %2625 = vmatpush1.bf16.msra.mxu0 %v1868
  %2626 = vmatprep.subr.bf16.mxu0 0
  %2627 = vmatpush1.bf16.msra.mxu0 %v1869
  %2628 = vmatprep.subr.bf16.mxu0 0
  %2629 = vmatpush1.bf16.msra.mxu0 %v1870
  %2630 = vmatprep.subr.bf16.mxu0 0
  %2631 = vmatpush1.bf16.msra.mxu0 %v1871
  %2632 = vmatprep.subr.bf16.mxu0 0
  %2633 = vmatpush1.bf16.msra.mxu0 %v1872
  %2634 = vmatprep.subr.bf16.mxu0 0
  %2635 = vmatpush1.bf16.msra.mxu0 %v1873
  %2636 = vmatprep.subr.bf16.mxu0 0
  %2637 = vmatpush1.bf16.msra.mxu0 %v1874
  %2638 = vmatprep.subr.bf16.mxu0 0
  %2639 = vmatpush1.bf16.msra.mxu0 %v1875
  %2640 = vmatprep.subr.bf16.mxu0 0
  %2641 = vmatpush1.bf16.msra.mxu0 %v1876
  %2642 = vmatprep.subr.bf16.mxu0 0
  %2643 = vmatpush1.bf16.msra.mxu0 %v1877
  %2644 = vmatprep.subr.bf16.mxu0 0
  %2645 = vmatpush1.bf16.msra.mxu0 %v1878
  %2646 = vmatprep.subr.bf16.mxu0 0
  %2647 = vmatpush1.bf16.msra.mxu0 %v1879
  %2648 = vmatprep.mubr.bf16.mxu0 %v637
  %2649 = vmatmul.mubr.bf16.gmra.mrb[0].mxu0 %v636
  %v2650 = vpop.f32.mrb[0].mxu0
  %v2651 = vadd.f32 %v2611, %v2650
  %v2652 = vpop.f32.mrb[0].mxu0
  %v2653 = vpop.f32.mrb[0].mxu0
  %v2654 = vpop.f32.mrb[0].mxu0
  %2655 = vdwg.mxu0
  %2656 = vmatprep.subr.bf16.mxu0 0
  %2657 = vmatpush1.bf16.msra.mxu0 %v1880
  %2658 = vmatprep.subr.bf16.mxu0 0
  %2659 = vmatpush1.bf16.msra.mxu0 %v1881
  %2660 = vmatprep.subr.bf16.mxu0 0
  %2661 = vmatpush1.bf16.msra.mxu0 %v1882
  %2662 = vmatprep.subr.bf16.mxu0 0
  %2663 = vmatpush1.bf16.msra.mxu0 %v1883
  %2664 = vmatprep.subr.bf16.mxu0 0
  %2665 = vmatpush1.bf16.msra.mxu0 %v1884
  %2666 = vmatprep.subr.bf16.mxu0 0
  %2667 = vmatpush1.bf16.msra.mxu0 %v1885
  %2668 = vmatprep.subr.bf16.mxu0 0
  %2669 = vmatpush1.bf16.msra.mxu0 %v1886
  %2670 = vmatprep.subr.bf16.mxu0 0
  %2671 = vmatpush1.bf16.msra.mxu0 %v1887
  %2672 = vmatprep.subr.bf16.mxu0 0
  %2673 = vmatpush1.bf16.msra.mxu0 %v1888
  %2674 = vmatprep.subr.bf16.mxu0 0
  %2675 = vmatpush1.bf16.msra.mxu0 %v1889
  %2676 = vmatprep.subr.bf16.mxu0 0
  %2677 = vmatpush1.bf16.msra.mxu0 %v1890
  %2678 = vmatprep.subr.bf16.mxu0 0
  %2679 = vmatpush1.bf16.msra.mxu0 %v1891
  %2680 = vmatprep.subr.bf16.mxu0 0
  %2681 = vmatpush1.bf16.msra.mxu0 %v1892
  %2682 = vmatprep.subr.bf16.mxu0 0
  %2683 = vmatpush1.bf16.msra.mxu0 %v1893
  %2684 = vmatprep.subr.bf16.mxu0 0
  %2685 = vmatpush1.bf16.msra.mxu0 %v1894
  %2686 = vmatprep.subr.bf16.mxu0 0
  %2687 = vmatpush1.bf16.msra.mxu0 %v1895
  %2688 = vmatprep.mubr.bf16.mxu0 %v639
  %2689 = vmatmul.mubr.bf16.gmra.mrb[0].mxu0 %v638
  %v2690 = vpop.f32.mrb[0].mxu0
  %v2691 = vadd.f32 %v2651, %v2690
  %v2692 = vpop.f32.mrb[0].mxu0
  %v2693 = vpop.f32.mrb[0].mxu0
  %v2694 = vpop.f32.mrb[0].mxu0
  %2695 = vdwg.mxu0
  %2696 = vmatprep.subr.bf16.mxu0 0
  %2697 = vmatpush1.bf16.msra.mxu0 %v1896
  %2698 = vmatprep.subr.bf16.mxu0 0
  %2699 = vmatpush1.bf16.msra.mxu0 %v1897
  %2700 = vmatprep.subr.bf16.mxu0 0
  %2701 = vmatpush1.bf16.msra.mxu0 %v1898
  %2702 = vmatprep.subr.bf16.mxu0 0
  %2703 = vmatpush1.bf16.msra.mxu0 %v1899
  %2704 = vmatprep.subr.bf16.mxu0 0
  %2705 = vmatpush1.bf16.msra.mxu0 %v1900
  %2706 = vmatprep.subr.bf16.mxu0 0
  %2707 = vmatpush1.bf16.msra.mxu0 %v1901
  %2708 = vmatprep.subr.bf16.mxu0 0
  %2709 = vmatpush1.bf16.msra.mxu0 %v1902
  %2710 = vmatprep.subr.bf16.mxu0 0
  %2711 = vmatpush1.bf16.msra.mxu0 %v1903
  %2712 = vmatprep.subr.bf16.mxu0 0
  %2713 = vmatpush1.bf16.msra.mxu0 %v1904
  %2714 = vmatprep.subr.bf16.mxu0 0
  %2715 = vmatpush1.bf16.msra.mxu0 %v1905
  %2716 = vmatprep.subr.bf16.mxu0 0
  %2717 = vmatpush1.bf16.msra.mxu0 %v1906
  %2718 = vmatprep.subr.bf16.mxu0 0
  %2719 = vmatpush1.bf16.msra.mxu0 %v1907
  %2720 = vmatprep.subr.bf16.mxu0 0
  %2721 = vmatpush1.bf16.msra.mxu0 %v1908
  %2722 = vmatprep.subr.bf16.mxu0 0
  %2723 = vmatpush1.bf16.msra.mxu0 %v1909
  %2724 = vmatprep.subr.bf16.mxu0 0
  %2725 = vmatpush1.bf16.msra.mxu0 %v1910
  %2726 = vmatprep.subr.bf16.mxu0 0
  %2727 = vmatpush1.bf16.msra.mxu0 %v1911
  %2728 = vmatprep.mubr.bf16.mxu0 %v641
  %2729 = vmatmul.mubr.bf16.gmra.mrb[0].mxu0 %v640
  %v2730 = vpop.f32.mrb[0].mxu0
  %v2731 = vadd.f32 %v2691, %v2730
  %v2732 = vpop.f32.mrb[0].mxu0
  %v2733 = vpop.f32.mrb[0].mxu0
  %v2734 = vpop.f32.mrb[0].mxu0
  %2735 = vdwg.mxu0
  %2736 = vmatprep.subr.bf16.mxu0 0
  %2737 = vmatpush1.bf16.msra.mxu0 %v1912
  %2738 = vmatprep.subr.bf16.mxu0 0
  %2739 = vmatpush1.bf16.msra.mxu0 %v1913
  %2740 = vmatprep.subr.bf16.mxu0 0
  %2741 = vmatpush1.bf16.msra.mxu0 %v1914
  %2742 = vmatprep.subr.bf16.mxu0 0
  %2743 = vmatpush1.bf16.msra.mxu0 %v1915
  %2744 = vmatprep.subr.bf16.mxu0 0
  %2745 = vmatpush1.bf16.msra.mxu0 %v1916
  %2746 = vmatprep.subr.bf16.mxu0 0
  %2747 = vmatpush1.bf16.msra.mxu0 %v1917
  %2748 = vmatprep.subr.bf16.mxu0 0
  %2749 = vmatpush1.bf16.msra.mxu0 %v1918
  %2750 = vmatprep.subr.bf16.mxu0 0
  %2751 = vmatpush1.bf16.msra.mxu0 %v1919
  %2752 = vmatprep.subr.bf16.mxu0 0
  %2753 = vmatpush1.bf16.msra.mxu0 %v1920
  %2754 = vmatprep.subr.bf16.mxu0 0
  %2755 = vmatpush1.bf16.msra.mxu0 %v1921
  %2756 = vmatprep.subr.bf16.mxu0 0
  %2757 = vmatpush1.bf16.msra.mxu0 %v1922
  %2758 = vmatprep.subr.bf16.mxu0 0
  %2759 = vmatpush1.bf16.msra.mxu0 %v1923
  %2760 = vmatprep.subr.bf16.mxu0 0
  %2761 = vmatpush1.bf16.msra.mxu0 %v1924
  %2762 = vmatprep.subr.bf16.mxu0 0
  %2763 = vmatpush1.bf16.msra.mxu0 %v1925
  %2764 = vmatprep.subr.bf16.mxu0 0
  %2765 = vmatpush1.bf16.msra.mxu0 %v1926
  %2766 = vmatprep.subr.bf16.mxu0 0
  %2767 = vmatpush1.bf16.msra.mxu0 %v1927
  %2768 = vmatprep.mubr.bf16.mxu0 %v643
  %2769 = vmatmul.mubr.bf16.gmra.mrb[0].mxu0 %v642
  %v2770 = vpop.f32.mrb[0].mxu0
  %v2771 = vadd.f32 %v2731, %v2770
  %v2772 = vpop.f32.mrb[0].mxu0
  %v2773 = vpop.f32.mrb[0].mxu0
  %v2774 = vpop.f32.mrb[0].mxu0
  %2775 = vdwg.mxu0
  %2776 = vmatprep.subr.bf16.mxu0 0
  %2777 = vmatpush1.bf16.msra.mxu0 %v1928
  %2778 = vmatprep.subr.bf16.mxu0 0
  %2779 = vmatpush1.bf16.msra.mxu0 %v1929
  %2780 = vmatprep.subr.bf16.mxu0 0
  %2781 = vmatpush1.bf16.msra.mxu0 %v1930
  %2782 = vmatprep.subr.bf16.mxu0 0
  %2783 = vmatpush1.bf16.msra.mxu0 %v1931
  %2784 = vmatprep.subr.bf16.mxu0 0
  %2785 = vmatpush1.bf16.msra.mxu0 %v1932
  %2786 = vmatprep.subr.bf16.mxu0 0
  %2787 = vmatpush1.bf16.msra.mxu0 %v1933
  %2788 = vmatprep.subr.bf16.mxu0 0
  %2789 = vmatpush1.bf16.msra.mxu0 %v1934
  %2790 = vmatprep.subr.bf16.mxu0 0
  %2791 = vmatpush1.bf16.msra.mxu0 %v1935
  %2792 = vmatprep.subr.bf16.mxu0 0
  %2793 = vmatpush1.bf16.msra.mxu0 %v1936
  %2794 = vmatprep.subr.bf16.mxu0 0
  %2795 = vmatpush1.bf16.msra.mxu0 %v1937
  %2796 = vmatprep.subr.bf16.mxu0 0
  %2797 = vmatpush1.bf16.msra.mxu0 %v1938
  %2798 = vmatprep.subr.bf16.mxu0 0
  %2799 = vmatpush1.bf16.msra.mxu0 %v1939
  %2800 = vmatprep.subr.bf16.mxu0 0
  %2801 = vmatpush1.bf16.msra.mxu0 %v1940
  %2802 = vmatprep.subr.bf16.mxu0 0
  %2803 = vmatpush1.bf16.msra.mxu0 %v1941
  %2804 = vmatprep.subr.bf16.mxu0 0
  %2805 = vmatpush1.bf16.msra.mxu0 %v1942
  %2806 = vmatprep.subr.bf16.mxu0 0
  %2807 = vmatpush1.bf16.msra.mxu0 %v1943
  %2808 = vmatprep.mubr.bf16.mxu0 %v645
  %2809 = vmatmul.mubr.bf16.gmra.mrb[0].mxu0 %v644
  %v2810 = vpop.f32.mrb[0].mxu0
  %v2811 = vadd.f32 %v2771, %v2810
  %v2812 = vpop.f32.mrb[0].mxu0
  %v2813 = vpop.f32.mrb[0].mxu0
  %v2814 = vpop.f32.mrb[0].mxu0
  %2815 = vdwg.mxu0
  %2816 = vmatprep.subr.bf16.mxu0 0
  %2817 = vmatpush1.bf16.msra.mxu0 %v1944
  %2818 = vmatprep.subr.bf16.mxu0 0
  %2819 = vmatpush1.bf16.msra.mxu0 %v1945
  %2820 = vmatprep.subr.bf16.mxu0 0
  %2821 = vmatpush1.bf16.msra.mxu0 %v1946
  %2822 = vmatprep.subr.bf16.mxu0 0
  %2823 = vmatpush1.bf16.msra.mxu0 %v1947
  %2824 = vmatprep.subr.bf16.mxu0 0
  %2825 = vmatpush1.bf16.msra.mxu0 %v1948
  %2826 = vmatprep.subr.bf16.mxu0 0
  %2827 = vmatpush1.bf16.msra.mxu0 %v1949
  %2828 = vmatprep.subr.bf16.mxu0 0
  %2829 = vmatpush1.bf16.msra.mxu0 %v1950
  %2830 = vmatprep.subr.bf16.mxu0 0
  %2831 = vmatpush1.bf16.msra.mxu0 %v1951
  %2832 = vmatprep.subr.bf16.mxu0 0
  %2833 = vmatpush1.bf16.msra.mxu0 %v1952
  %2834 = vmatprep.subr.bf16.mxu0 0
  %2835 = vmatpush1.bf16.msra.mxu0 %v1953
  %2836 = vmatprep.subr.bf16.mxu0 0
  %2837 = vmatpush1.bf16.msra.mxu0 %v1954
  %2838 = vmatprep.subr.bf16.mxu0 0
  %2839 = vmatpush1.bf16.msra.mxu0 %v1955
  %2840 = vmatprep.subr.bf16.mxu0 0
  %2841 = vmatpush1.bf16.msra.mxu0 %v1956
  %2842 = vmatprep.subr.bf16.mxu0 0
  %2843 = vmatpush1.bf16.msra.mxu0 %v1957
  %2844 = vmatprep.subr.bf16.mxu0 0
  %2845 = vmatpush1.bf16.msra.mxu0 %v1958
  %2846 = vmatprep.subr.bf16.mxu0 0
  %2847 = vmatpush1.bf16.msra.mxu0 %v1959
  %2848 = vmatprep.mubr.bf16.mxu0 %v647
  %2849 = vmatmul.mubr.bf16.gmra.mrb[0].mxu0 %v646
  %v2850 = vpop.f32.mrb[0].mxu0
  %v2851 = vadd.f32 %v2811, %v2850
  %v2852 = vpop.f32.mrb[0].mxu0
  %v2853 = vpop.f32.mrb[0].mxu0
  %v2854 = vpop.f32.mrb[0].mxu0
  %2855 = vdwg.mxu0
  %v2856 = vmax.f32 %v2851, 0.0
  %v2857 = vld [vmem:[%s1] sm:$0xff]
  %v2858 = vld [vmem:[%s4] sm:$0x3]
  %2860 = vset.pattern.permute.xlu0 0
  %2861 = vperm.xlu0 %2860, %v2857
  %v2862 = vpop.permute.xlu0 %2861
  %v2864 = vlaneseq
  %v2865 = vshrl.u32 %v2864, 7
  %v2866 = vsub.s32 0, %v2865
  %v2867 = vrot.slane %v2858, %v2866
  %v2868 = vmul.f32 %v2862, %v2867
  %2869 = vset.pattern.permute.xlu0 1
  %2870 = vperm.xlu0 %2869, %v2857
  %v2871 = vpop.permute.xlu0 %2870
  %v2873 = vlaneseq
  %v2874 = vshrl.u32 %v2873, 7
  %v2875 = vsub.s32 1, %v2874
  %v2876 = vrot.slane %v2858, %v2875
  %v2877 = vmul.f32 %v2871, %v2876
  %v2878 = vadd.f32 %v2868, %v2877
  %v2879 = vld [vmem:[%s5] sm:$0x1]
  %v2881 = vlaneseq
  %v2882 = vshrl.u32 %v2881, 7
  %v2883 = vsub.s32 0, %v2882
  %v2884 = vrot.slane %v2879, %v2883
  %v2886 = vadd.f32 %v2878, %v2884
  %v2887 = vmax.f32 %v2886, 0.0
  %v2888 = vpack.c.bf16 %v2856, %v2856
  %v2889 = vld [vmem:[%s6] sm:$0xf]
  %v2890 = vld [vmem:[%s6 + $0x4] sm:$0xf]
  %v2891 = vld [vmem:[%s6 + $0x8] sm:$0xf]
  %v2892 = vld [vmem:[%s6 + $0xc] sm:$0xf]
  %v2893 = vld [vmem:[%s6 + $0x10] sm:$0xf]
  %v2894 = vld [vmem:[%s6 + $0x14] sm:$0xf]
  %v2895 = vld [vmem:[%s6 + $0x18] sm:$0xf]
  %v2896 = vld [vmem:[%s6 + $0x1c] sm:$0xf]
  %v2897 = vld [vmem:[%s6 + $0x20] sm:$0xf]
  %v2898 = vld [vmem:[%s6 + $0x24] sm:$0xf]
  %v2899 = vld [vmem:[%s6 + $0x28] sm:$0xf]
  %v2900 = vld [vmem:[%s6 + $0x2c] sm:$0xf]
  %v2901 = vld [vmem:[%s6 + $0x30] sm:$0xf]
  %v2902 = vld [vmem:[%s6 + $0x34] sm:$0xf]
  %v2903 = vld [vmem:[%s6 + $0x38] sm:$0xf]
  %v2904 = vld [vmem:[%s6 + $0x3c] sm:$0xf]
  %v2905 = vpack.c.bf16 %v2887, %v2887
  %v2906 = vld [vmem:[%s7] sm:$0xf]
  %v2907 = vld [vmem:[%s7 + $0x4] sm:$0xf]
  %v2908 = vld [vmem:[%s7 + $0x8] sm:$0xf]
  %v2909 = vld [vmem:[%s7 + $0xc] sm:$0xf]
  %v2910 = vld [vmem:[%s7 + $0x10] sm:$0xf]
  %v2911 = vld [vmem:[%s7 + $0x14] sm:$0xf]
  %v2912 = vld [vmem:[%s7 + $0x18] sm:$0xf]
  %v2913 = vld [vmem:[%s7 + $0x1c] sm:$0xf]
  %v2914 = vld [vmem:[%s7 + $0x20] sm:$0xf]
  %v2915 = vld [vmem:[%s7 + $0x24] sm:$0xf]
  %v2916 = vld [vmem:[%s7 + $0x28] sm:$0xf]
  %v2917 = vld [vmem:[%s7 + $0x2c] sm:$0xf]
  %v2918 = vld [vmem:[%s7 + $0x30] sm:$0xf]
  %v2919 = vld [vmem:[%s7 + $0x34] sm:$0xf]
  %v2920 = vld [vmem:[%s7 + $0x38] sm:$0xf]
  %v2921 = vld [vmem:[%s7 + $0x3c] sm:$0xf]
  %v2938 = vunpack.c.l.b16 %v2906
  %v2939 = vunpack.c.l.b16 %v2907
  %v2940 = vunpack.c.l.b16 %v2908
  %v2941 = vunpack.c.l.b16 %v2909
  %v2942 = vunpack.c.l.b16 %v2910
  %v2943 = vunpack.c.l.b16 %v2911
  %v2944 = vunpack.c.l.b16 %v2912
  %v2945 = vunpack.c.l.b16 %v2913
  %v2946 = vunpack.c.l.b16 %v2914
  %v2947 = vunpack.c.l.b16 %v2915
  %v2948 = vunpack.c.l.b16 %v2916
  %v2949 = vunpack.c.l.b16 %v2917
  %v2950 = vunpack.c.l.b16 %v2918
  %v2951 = vunpack.c.l.b16 %v2919
  %v2952 = vunpack.c.l.b16 %v2920
  %v2953 = vunpack.c.l.b16 %v2921
  %v2954 = vpack.c.b16 %v2939, %v2938
  %v2955 = vpack.c.b16 %v2941, %v2940
  %v2956 = vpack.c.b16 %v2943, %v2942
  %v2957 = vpack.c.b16 %v2945, %v2944
  %v2958 = vpack.c.b16 %v2947, %v2946
  %v2959 = vpack.c.b16 %v2949, %v2948
  %v2960 = vpack.c.b16 %v2951, %v2950
  %v2961 = vpack.c.b16 %v2953, %v2952
  %2970 = vmatprep.subr.bf16.mxu0 0
  %2971 = vmatpush1.bf16.msra.mxu0 %v2954
  %2972 = vmatprep.subr.bf16.mxu0 0
  %2973 = vmatpush1.bf16.msra.mxu0 %v2955
  %2974 = vmatprep.subr.bf16.mxu0 0
  %2975 = vmatpush1.bf16.msra.mxu0 %v2956
  %2976 = vmatprep.subr.bf16.mxu0 0
  %2977 = vmatpush1.bf16.msra.mxu0 %v2957
  %2978 = vmatprep.subr.bf16.mxu0 0
  %2979 = vmatpush1.bf16.msra.mxu0 %v2958
  %2980 = vmatprep.subr.bf16.mxu0 0
  %2981 = vmatpush1.bf16.msra.mxu0 %v2959
  %2982 = vmatprep.subr.bf16.mxu0 0
  %2983 = vmatpush1.bf16.msra.mxu0 %v2960
  %2984 = vmatprep.subr.bf16.mxu0 0
  %2985 = vmatpush1.bf16.msra.mxu0 %v2961
  %2986 = vmatprep.subr.bf16.mxu0 0
  %2987 = vmatpush1.bf16.msra.mxu0 0
  %2988 = vmatprep.subr.bf16.mxu0 0
  %2989 = vmatpush1.bf16.msra.mxu0 0
  %2990 = vmatprep.subr.bf16.mxu0 0
  %2991 = vmatpush1.bf16.msra.mxu0 0
  %2992 = vmatprep.subr.bf16.mxu0 0
  %2993 = vmatpush1.bf16.msra.mxu0 0
  %2994 = vmatprep.subr.bf16.mxu0 0
  %2995 = vmatpush1.bf16.msra.mxu0 0
  %2996 = vmatprep.subr.bf16.mxu0 0
  %2997 = vmatpush1.bf16.msra.mxu0 0
  %2998 = vmatprep.subr.bf16.mxu0 0
  %2999 = vmatpush1.bf16.msra.mxu0 0
  %3000 = vmatprep.subr.bf16.mxu0 0
  %3001 = vmatpush1.bf16.msra.mxu0 0
  %3002 = vmatprep.mubr.bf16.mxu0 0
  %3003 = vmatmul.mubr.bf16.gmra.mrb[0].mxu0 %v2905
  %v3004 = vpop.f32.mrb[0].mxu0
  %v3005 = vadd.f32 0.0, %v3004
  %v3006 = vpop.f32.mrb[0].mxu0
  %v3007 = vpop.f32.mrb[0].mxu0
  %v3008 = vpop.f32.mrb[0].mxu0
  %3009 = vdwg.mxu0
  %v3026 = vunpack.c.l.b16 %v2889
  %v3027 = vunpack.c.l.b16 %v2890
  %v3028 = vunpack.c.l.b16 %v2891
  %v3029 = vunpack.c.l.b16 %v2892
  %v3030 = vunpack.c.l.b16 %v2893
  %v3031 = vunpack.c.l.b16 %v2894
  %v3032 = vunpack.c.l.b16 %v2895
  %v3033 = vunpack.c.l.b16 %v2896
  %v3034 = vunpack.c.l.b16 %v2897
  %v3035 = vunpack.c.l.b16 %v2898
  %v3036 = vunpack.c.l.b16 %v2899
  %v3037 = vunpack.c.l.b16 %v2900
  %v3038 = vunpack.c.l.b16 %v2901
  %v3039 = vunpack.c.l.b16 %v2902
  %v3040 = vunpack.c.l.b16 %v2903
  %v3041 = vunpack.c.l.b16 %v2904
  %v3042 = vpack.c.b16 %v3027, %v3026
  %v3043 = vpack.c.b16 %v3029, %v3028
  %v3044 = vpack.c.b16 %v3031, %v3030
  %v3045 = vpack.c.b16 %v3033, %v3032
  %v3046 = vpack.c.b16 %v3035, %v3034
  %v3047 = vpack.c.b16 %v3037, %v3036
  %v3048 = vpack.c.b16 %v3039, %v3038
  %v3049 = vpack.c.b16 %v3041, %v3040
  %3058 = vmatprep.subr.bf16.mxu0 0
  %3059 = vmatpush1.bf16.msra.mxu0 %v3042
  %3060 = vmatprep.subr.bf16.mxu0 0
  %3061 = vmatpush1.bf16.msra.mxu0 %v3043
  %3062 = vmatprep.subr.bf16.mxu0 0
  %3063 = vmatpush1.bf16.msra.mxu0 %v3044
  %3064 = vmatprep.subr.bf16.mxu0 0
  %3065 = vmatpush1.bf16.msra.mxu0 %v3045
  %3066 = vmatprep.subr.bf16.mxu0 0
  %3067 = vmatpush1.bf16.msra.mxu0 %v3046
  %3068 = vmatprep.subr.bf16.mxu0 0
  %3069 = vmatpush1.bf16.msra.mxu0 %v3047
  %3070 = vmatprep.subr.bf16.mxu0 0
  %3071 = vmatpush1.bf16.msra.mxu0 %v3048
  %3072 = vmatprep.subr.bf16.mxu0 0
  %3073 = vmatpush1.bf16.msra.mxu0 %v3049
  %3074 = vmatprep.subr.bf16.mxu0 0
  %3075 = vmatpush1.bf16.msra.mxu0 0
  %3076 = vmatprep.subr.bf16.mxu0 0
  %3077 = vmatpush1.bf16.msra.mxu0 0
  %3078 = vmatprep.subr.bf16.mxu0 0
  %3079 = vmatpush1.bf16.msra.mxu0 0
  %3080 = vmatprep.subr.bf16.mxu0 0
  %3081 = vmatpush1.bf16.msra.mxu0 0
  %3082 = vmatprep.subr.bf16.mxu0 0
  %3083 = vmatpush1.bf16.msra.mxu0 0
  %3084 = vmatprep.subr.bf16.mxu0 0
  %3085 = vmatpush1.bf16.msra.mxu0 0
  %3086 = vmatprep.subr.bf16.mxu0 0
  %3087 = vmatpush1.bf16.msra.mxu0 0
  %3088 = vmatprep.subr.bf16.mxu0 0
  %3089 = vmatpush1.bf16.msra.mxu0 0
  %3090 = vmatprep.mubr.bf16.mxu0 0
  %3091 = vmatmul.mubr.bf16.gmra.mrb[0].mxu0 %v2888
  %v3092 = vpop.f32.mrb[0].mxu0
  %v3093 = vadd.f32 %v3005, %v3092
  %v3094 = vpop.f32.mrb[0].mxu0
  %v3095 = vpop.f32.mrb[0].mxu0
  %v3096 = vpop.f32.mrb[0].mxu0
  %3097 = vdwg.mxu0
  %v3098 = vld [vmem:[%s8] sm:$0x1]
  %v3100 = vlaneseq
  %v3101 = vshrl.u32 %v3100, 7
  %v3102 = vsub.s32 0, %v3101
  %v3103 = vrot.slane %v3098, %v3102
  %v3105 = vadd.f32 %v3093, %v3103
  %v3106 = vmax.f32 %v3105, 0.0
  %3107 = vst [vmem:[%s9] sm:$0xff] %v3106
  // Predicated region
  $region38: #{glimpse_net_forward.1} parent=0 // pred_check
    _
  $region39: #{glimpse_net_forward.1} parent=0 // pred_check_branch
    %3109 = sbr.rel (0) target = $region41
  $region40: #{glimpse_net_forward.1} parent=0 // pred_region
    _
  $region41: #{glimpse_net_forward.1} parent=0 // pred_fallthru
    _
  // Predicated region
  $region42: #{glimpse_net_forward.1} parent=0 // pred_check
    _
  $region43: #{glimpse_net_forward.1} parent=0 // pred_check_branch
    %3111 = sbr.rel (0) target = $region45
  $region44: #{glimpse_net_forward.1} parent=0 // pred_region
    _
  $region45: #{glimpse_net_forward.1} parent=0 // pred_fallthru
    _

</llo_original>
